<compile_context>
chip_gen: v7x
topology: tpu7x:2x2x1
jax: 0.10.0
libtpu: 0.0.40
codegen_flags: <defaults>
</compile_context>

<pallas_src>
import math
from functools import partial

import jax
import jax.numpy as jnp
import numpy as np
from jax.experimental import pallas as pl

D_MODEL = 32     # model dim
NHEAD = 4        # attention heads
DHEAD = D_MODEL // NHEAD
DFF = 64         # FFN hidden dim
EPS = 1e-5


# ----------------------------- kernel helpers ------------------------------

def _layer_norm(x, gamma, beta):
    mu = jnp.mean(x, axis=-1, keepdims=True)
    var = jnp.mean((x - mu) ** 2, axis=-1, keepdims=True)
    return (x - mu) * jax.lax.rsqrt(var + EPS) * gamma + beta


# ------------------------------ Pallas kernel -------------------------------

def encoder_layer_kernel(src_ref, pos_ref, wqk_ref, wv_ref, wo_ref,
                         w1_ref, w2_ref, bqk_ref, vec_ref, b1_ref,
                         out_ref, *, batch, seq):
    """Fused post-norm TransformerEncoderLayer forward (batch-major rows).

    src_ref/pos_ref/out_ref : [B*S, D]   rows are batch-major (b*S + s)
    wqk_ref                 : [D, 2D]    (Wq^T * scale  ||  Wk^T)
    wv_ref / wo_ref         : [D, D]     Wv^T / Wo^T
    w1_ref / w2_ref         : [D, DFF] / [DFF, D]   FFN weights, pre-transposed
    bqk_ref                 : [1, 2D]    (bq * scale || bk)
    vec_ref                 : [7, D]     (bv, bo, b2, n1_g, n1_b, n2_g, n2_b)
    b1_ref                  : [1, DFF]   linear1.bias
    """
    B, S, D, H, DH = batch, seq, D_MODEL, NHEAD, DHEAD
    N = B * S
    G = H * B                                     # batched-attention groups

    x = src_ref[...].astype(jnp.float32)          # [N, D]
    xp = x + pos_ref[...].astype(jnp.float32)     # q = k = src + pos

    vecs = vec_ref[...]
    bv, bo, b2 = vecs[0:1], vecs[1:2], vecs[2:3]
    n1_g, n1_b = vecs[3:4], vecs[4:5]
    n2_g, n2_b = vecs[5:6], vecs[6:7]

    # --- fused Q||K projection (softmax scale already folded into Wq/bq) ---
    qk = jnp.dot(xp, wqk_ref[...], preferred_element_type=jnp.float32) \
        + bqk_ref[...]                                            # [N, 2D]
    v = jnp.dot(x, wv_ref[...], preferred_element_type=jnp.float32) + bv

    # Head-major rearrangement: one reshape + one minor-preserving transpose
    # per tensor (replaces the previous per-head lane slices / concats).
    qk4 = qk.reshape(N, 2 * H, DH).transpose(1, 0, 2)             # [2H, N, DH]
    qk4 = qk4.reshape(2 * H, B, S, DH)
    q_g = qk4[:H].reshape(G, S, DH)                               # [G, S, DH]
    k_g = qk4[H:].reshape(G, S, DH)
    v_g = v.reshape(N, H, DH).transpose(1, 0, 2).reshape(G, S, DH)

    # --- batched multi-head attention (no mask: src_mask/key_padding None) ---
    # TODO(synk): src_mask / src_key_padding_mask not applied.
    s = jnp.einsum('gqd,gkd->gqk', q_g, k_g,
                   preferred_element_type=jnp.float32)            # [G, S, S]
    s = s - jnp.max(s, axis=-1, keepdims=True)
    e = jnp.exp(s)
    probs = e * pl.reciprocal(jnp.sum(e, axis=-1, keepdims=True))  # exact
    o_g = jnp.einsum('gqk,gkd->gqd', probs, v_g,
                     preferred_element_type=jnp.float32)          # [G, S, DH]

    # back to [N, D] with head-major lanes, then output projection
    o = o_g.reshape(H, N, DH).transpose(1, 0, 2).reshape(N, D)
    attn = jnp.dot(o, wo_ref[...], preferred_element_type=jnp.float32) + bo

    # --- add & norm 1 ---
    y1 = _layer_norm(x + attn, n1_g, n1_b)

    # --- FFN: Linear -> ReLU -> Linear, add & norm 2 ---
    hid = jnp.maximum(
        jnp.dot(y1, w1_ref[...], preferred_element_type=jnp.float32)
        + b1_ref[...], 0.0)
    ff = jnp.dot(hid, w2_ref[...], preferred_element_type=jnp.float32) + b2
    y2 = _layer_norm(y1 + ff, n2_g, n2_b)

    out_ref[...] = y2.astype(out_ref.dtype)


# ------------------------------- wrappers -----------------------------------

def prepare_params(pt_params):
    """Pack / pre-transpose PyTorch-convention parameters for the kernel."""
    (in_w, in_b, out_w, out_b, l1_w, l1_b, l2_w, l2_b,
     n1_g, n1_b, n2_g, n2_b) = pt_params
    d = D_MODEL
    scale = 1.0 / math.sqrt(DHEAD)
    wqk = jnp.concatenate([in_w[:d].T * scale, in_w[d:2 * d].T], axis=1)
    bqk = jnp.concatenate([in_b[:d] * scale, in_b[d:2 * d]])[None, :]
    vecs = jnp.stack([in_b[2 * d:], out_b, l2_b,
                      n1_g, n1_b, n2_g, n2_b], axis=0)             # (7, D)
    return dict(wqk=wqk, wv=in_w[2 * d:].T, wo=out_w.T,
                w1=l1_w.T, w2=l2_w.T, bqk=bqk, vecs=vecs,
                b1=l1_b[None, :])


@jax.jit
def transformer_encoder_layer(src, pos, params):
    """src/pos: [S, B, D] (PyTorch layout) -> [S, B, D]. One fused call."""
    S, B, D = src.shape
    # Batch-major activation layout chosen once, wrapper-side (tiny permute).
    src_bm = jnp.transpose(src, (1, 0, 2)).reshape(B * S, D)
    pos_bm = jnp.transpose(pos, (1, 0, 2)).reshape(B * S, D)
    kernel = partial(encoder_layer_kernel, batch=B, seq=S)
    out_bm = pl.pallas_call(
        kernel,
        out_shape=jax.ShapeDtypeStruct((B * S, D), src.dtype),
    )(src_bm, pos_bm, params["wqk"], params["wv"], params["wo"],
      params["w1"], params["w2"], params["bqk"], params["vecs"], params["b1"])
    return jnp.transpose(out_bm.reshape(B, S, D), (1, 0, 2))


# --------------------------- numpy reference (f32) ---------------------------

def _reference(src, pos, pt_params):
    (in_w, in_b, out_w, out_b, l1_w, l1_b, l2_w, l2_b,
     ng1, nb1, ng2, nb2) = [np.asarray(p, np.float32) for p in pt_params]
    src = np.asarray(src, np.float32)
    pos = np.asarray(pos, np.float32)
    S, B, D = src.shape
    H, DH = NHEAD, DHEAD

    def lin(x, w, b):
        return x @ w.T + b

    def ln(x, g, b):
        mu = x.mean(-1, keepdims=True)
        var = ((x - mu) ** 2).mean(-1, keepdims=True)
        return (x - mu) / np.sqrt(var + EPS) * g + b

    xp = src + pos
    q = lin(xp, in_w[:D], in_b[:D]) * (DH ** -0.5)
    k = lin(xp, in_w[D:2 * D], in_b[D:2 * D])
    v = lin(src, in_w[2 * D:], in_b[2 * D:])

    def heads(t):          # [S,B,D] -> [B,H,S,DH]
        return t.reshape(S, B, H, DH).transpose(1, 2, 0, 3)

    qh, kh, vh = heads(q), heads(k), heads(v)
    s = qh @ kh.transpose(0, 1, 3, 2)
    s = s - s.max(-1, keepdims=True)
    e = np.exp(s)
    p = e / e.sum(-1, keepdims=True)
    o = (p @ vh).transpose(2, 0, 1, 3).reshape(S, B, D)
    attn = lin(o, out_w, out_b)
    y1 = ln(src + attn, ng1, nb1)
    ff = lin(np.maximum(lin(y1, l1_w, l1_b), 0.0), l2_w, l2_b)
    return ln(y1 + ff, ng2, nb2)


# --------------------------------- main --------------------------------------

if __name__ == "__main__":
    key = jax.random.PRNGKey(0)
    S, B = 8, 2
    ks = jax.random.split(key, 8)

    src = jax.random.normal(ks[0], (S, B, D_MODEL), jnp.float32)   # [S, B, D]
    pos = jax.random.normal(ks[1], (S, B, D_MODEL), jnp.float32)

    w = lambda k, shape: jax.random.normal(k, shape, jnp.float32) * 0.02
    pt_params = (
        w(ks[2], (3 * D_MODEL, D_MODEL)),                 # in_proj_weight
        w(ks[6], (3 * D_MODEL,)),                         # in_proj_bias
        w(ks[3], (D_MODEL, D_MODEL)),                     # out_proj.weight
        w(ks[7], (D_MODEL,)),                             # out_proj.bias
        w(ks[4], (DFF, D_MODEL)),                         # linear1.weight
        jnp.zeros((DFF,), jnp.float32),                   # linear1.bias
        w(ks[5], (D_MODEL, DFF)),                         # linear2.weight
        jnp.zeros((D_MODEL,), jnp.float32),               # linear2.bias
        jnp.ones((D_MODEL,), jnp.float32),                # norm1.weight
        jnp.zeros((D_MODEL,), jnp.float32),               # norm1.bias
        jnp.ones((D_MODEL,), jnp.float32),                # norm2.weight
        jnp.zeros((D_MODEL,), jnp.float32),               # norm2.bias
    )
    params = prepare_params(pt_params)

    out = transformer_encoder_layer(src, pos, params)
    jax.block_until_ready(out)
    assert out.shape == (S, B, D_MODEL)
    assert bool(jnp.all(jnp.isfinite(out)))

    ref = _reference(src, pos, pt_params)
    np.testing.assert_allclose(np.asarray(out), ref, rtol=1e-2, atol=1e-2)

    print("KERNEL_OK")
</pallas_src>

<mosaic_0001>
module attributes {stable_mosaic.version = 11 : i64} {
  func.func @encoder_layer_kernel(%arg0: memref<16x32xf32, #tpu.memory_space<vmem>>, %arg1: memref<16x32xf32, #tpu.memory_space<vmem>>, %arg2: memref<32x64xf32, #tpu.memory_space<vmem>>, %arg3: memref<32x32xf32, #tpu.memory_space<vmem>>, %arg4: memref<32x32xf32, #tpu.memory_space<vmem>>, %arg5: memref<32x64xf32, #tpu.memory_space<vmem>>, %arg6: memref<64x32xf32, #tpu.memory_space<vmem>>, %arg7: memref<1x64xf32, #tpu.memory_space<vmem>>, %arg8: memref<7x32xf32, #tpu.memory_space<vmem>>, %arg9: memref<1x64xf32, #tpu.memory_space<vmem>>, %arg10: memref<16x32xf32, #tpu.memory_space<vmem>>) attributes {dimension_semantics = [], scalar_prefetch = 0 : i64, scratch_operands = 0 : i64, tpu.core_type = #tpu.core_type<tc>} {
    %c0 = arith.constant 0 : index
    %c0_0 = arith.constant 0 : index
    %0 = vector.load %arg0[%c0, %c0_0] : memref<16x32xf32, #tpu.memory_space<vmem>>, vector<16x32xf32>
    %c0_1 = arith.constant 0 : index
    %c0_2 = arith.constant 0 : index
    %1 = vector.load %arg1[%c0_1, %c0_2] : memref<16x32xf32, #tpu.memory_space<vmem>>, vector<16x32xf32>
    %2 = arith.addf %0, %1 : vector<16x32xf32>
    %c0_3 = arith.constant 0 : index
    %c0_4 = arith.constant 0 : index
    %3 = vector.load %arg8[%c0_3, %c0_4] : memref<7x32xf32, #tpu.memory_space<vmem>>, vector<7x32xf32>
    %4 = vector.extract_strided_slice %3 {offsets = [0, 0], sizes = [1, 32], strides = [1, 1]} : vector<7x32xf32> to vector<1x32xf32>
    %5 = vector.extract_strided_slice %3 {offsets = [1, 0], sizes = [1, 32], strides = [1, 1]} : vector<7x32xf32> to vector<1x32xf32>
    %6 = vector.extract_strided_slice %3 {offsets = [2, 0], sizes = [1, 32], strides = [1, 1]} : vector<7x32xf32> to vector<1x32xf32>
    %7 = vector.extract_strided_slice %3 {offsets = [3, 0], sizes = [1, 32], strides = [1, 1]} : vector<7x32xf32> to vector<1x32xf32>
    %8 = vector.extract_strided_slice %3 {offsets = [4, 0], sizes = [1, 32], strides = [1, 1]} : vector<7x32xf32> to vector<1x32xf32>
    %9 = vector.extract_strided_slice %3 {offsets = [5, 0], sizes = [1, 32], strides = [1, 1]} : vector<7x32xf32> to vector<1x32xf32>
    %10 = vector.extract_strided_slice %3 {offsets = [6, 0], sizes = [1, 32], strides = [1, 1]} : vector<7x32xf32> to vector<1x32xf32>
    %c0_5 = arith.constant 0 : index
    %c0_6 = arith.constant 0 : index
    %11 = vector.load %arg2[%c0_5, %c0_6] : memref<32x64xf32, #tpu.memory_space<vmem>>, vector<32x64xf32>
    %cst = arith.constant dense<0.000000e+00> : vector<16x64xf32>
    %12 = tpu.matmul %2, %11, %cst {dimension_numbers = #tpu.dot_dimension_numbers<[1], [0], [0], [1], [0, 0, 1, 1], [], []>} : vector<16x32xf32>, vector<32x64xf32>, vector<16x64xf32> -> vector<16x64xf32>
    %c0_7 = arith.constant 0 : index
    %c0_8 = arith.constant 0 : index
    %13 = vector.load %arg7[%c0_7, %c0_8] : memref<1x64xf32, #tpu.memory_space<vmem>>, vector<1x64xf32>
    %14 = vector.broadcast %13 : vector<1x64xf32> to vector<16x64xf32>
    %15 = arith.addf %12, %14 : vector<16x64xf32>
    %c0_9 = arith.constant 0 : index
    %c0_10 = arith.constant 0 : index
    %16 = vector.load %arg3[%c0_9, %c0_10] : memref<32x32xf32, #tpu.memory_space<vmem>>, vector<32x32xf32>
    %cst_11 = arith.constant dense<0.000000e+00> : vector<16x32xf32>
    %17 = tpu.matmul %0, %16, %cst_11 {dimension_numbers = #tpu.dot_dimension_numbers<[1], [0], [0], [1], [0, 0, 1, 1], [], []>} : vector<16x32xf32>, vector<32x32xf32>, vector<16x32xf32> -> vector<16x32xf32>
    %18 = vector.broadcast %4 : vector<1x32xf32> to vector<16x32xf32>
    %19 = arith.addf %17, %18 : vector<16x32xf32>
    %20 = vector.shape_cast %15 : vector<16x64xf32> to vector<16x8x8xf32>
    %21 = tpu.transpose %20, [1, 0, 2] : vector<16x8x8xf32> -> vector<8x16x8xf32>
    %22 = vector.shape_cast %21 : vector<8x16x8xf32> to vector<8x2x8x8xf32>
    %23 = vector.extract_strided_slice %22 {offsets = [0, 0, 0, 0], sizes = [4, 2, 8, 8], strides = [1, 1, 1, 1]} : vector<8x2x8x8xf32> to vector<4x2x8x8xf32>
    %24 = vector.shape_cast %23 : vector<4x2x8x8xf32> to vector<8x8x8xf32>
    %25 = vector.extract_strided_slice %22 {offsets = [4, 0, 0, 0], sizes = [4, 2, 8, 8], strides = [1, 1, 1, 1]} : vector<8x2x8x8xf32> to vector<4x2x8x8xf32>
    %26 = vector.shape_cast %25 : vector<4x2x8x8xf32> to vector<8x8x8xf32>
    %27 = vector.shape_cast %19 : vector<16x32xf32> to vector<16x4x8xf32>
    %28 = tpu.transpose %27, [1, 0, 2] : vector<16x4x8xf32> -> vector<4x16x8xf32>
    %29 = vector.shape_cast %28 : vector<4x16x8xf32> to vector<8x8x8xf32>
    "tpu.trace_start"() <{level = 10 : i32, message = "gqd,gkd->gqk"}> : () -> ()
    %cst_12 = arith.constant dense<0.000000e+00> : vector<8x8x8xf32>
    %30 = tpu.matmul %24, %26, %cst_12 {dimension_numbers = #tpu.dot_dimension_numbers<[2], [2], [1], [1], [0, 0, 0, 1, 1, 1], [0], [0]>} : vector<8x8x8xf32>, vector<8x8x8xf32>, vector<8x8x8xf32> -> vector<8x8x8xf32>
    "tpu.trace_stop"() : () -> ()
    %cst_13 = arith.constant dense<0xFF800000> : vector<8x8xf32>
    %31 = vector.multi_reduction <maximumf>, %30, %cst_13 [2] : vector<8x8x8xf32> to vector<8x8xf32>
    %32 = vector.shape_cast %31 : vector<8x8xf32> to vector<8x8x1xf32>
    %33 = vector.broadcast %32 : vector<8x8x1xf32> to vector<8x8x8xf32>
    %34 = arith.subf %30, %33 : vector<8x8x8xf32>
    %35 = math.exp %34 : vector<8x8x8xf32>
    %cst_14 = arith.constant dense<0.000000e+00> : vector<8x8xf32>
    %36 = vector.multi_reduction <add>, %35, %cst_14 [2] : vector<8x8x8xf32> to vector<8x8xf32>
    %37 = vector.shape_cast %36 : vector<8x8xf32> to vector<8x8x1xf32>
    %38 = tpu.reciprocal %37 : vector<8x8x1xf32> -> vector<8x8x1xf32>
    %39 = vector.broadcast %38 : vector<8x8x1xf32> to vector<8x8x8xf32>
    %40 = arith.mulf %35, %39 : vector<8x8x8xf32>
    "tpu.trace_start"() <{level = 10 : i32, message = "gqk,gkd->gqd"}> : () -> ()
    %cst_15 = arith.constant dense<0.000000e+00> : vector<8x8x8xf32>
    %41 = tpu.matmul %40, %29, %cst_15 {dimension_numbers = #tpu.dot_dimension_numbers<[2], [1], [1], [2], [0, 0, 0, 1, 1, 2], [0], [0]>} : vector<8x8x8xf32>, vector<8x8x8xf32>, vector<8x8x8xf32> -> vector<8x8x8xf32>
    "tpu.trace_stop"() : () -> ()
    %42 = vector.shape_cast %41 : vector<8x8x8xf32> to vector<4x16x8xf32>
    %43 = tpu.transpose %42, [1, 0, 2] : vector<4x16x8xf32> -> vector<16x4x8xf32>
    %44 = vector.shape_cast %43 : vector<16x4x8xf32> to vector<16x32xf32>
    %c0_16 = arith.constant 0 : index
    %c0_17 = arith.constant 0 : index
    %45 = vector.load %arg4[%c0_16, %c0_17] : memref<32x32xf32, #tpu.memory_space<vmem>>, vector<32x32xf32>
    %cst_18 = arith.constant dense<0.000000e+00> : vector<16x32xf32>
    %46 = tpu.matmul %44, %45, %cst_18 {dimension_numbers = #tpu.dot_dimension_numbers<[1], [0], [0], [1], [0, 0, 1, 1], [], []>} : vector<16x32xf32>, vector<32x32xf32>, vector<16x32xf32> -> vector<16x32xf32>
    %47 = vector.broadcast %5 : vector<1x32xf32> to vector<16x32xf32>
    %48 = arith.addf %46, %47 : vector<16x32xf32>
    %49 = arith.addf %0, %48 : vector<16x32xf32>
    %cst_19 = arith.constant dense<0.000000e+00> : vector<16xf32>
    %50 = vector.multi_reduction <add>, %49, %cst_19 [1] : vector<16x32xf32> to vector<16xf32>
    %51 = vector.shape_cast %50 : vector<16xf32> to vector<16x1xf32>
    %cst_20 = arith.constant 3.200000e+01 : f32
    %52 = vector.broadcast %cst_20 : f32 to vector<16x1xf32>
    %53 = arith.divf %51, %52 : vector<16x1xf32>
    %54 = vector.broadcast %53 : vector<16x1xf32> to vector<16x32xf32>
    %55 = arith.subf %49, %54 : vector<16x32xf32>
    %56 = arith.mulf %55, %55 : vector<16x32xf32>
    %cst_21 = arith.constant dense<0.000000e+00> : vector<16xf32>
    %57 = vector.multi_reduction <add>, %56, %cst_21 [1] : vector<16x32xf32> to vector<16xf32>
    %58 = vector.shape_cast %57 : vector<16xf32> to vector<16x1xf32>
    %cst_22 = arith.constant 3.200000e+01 : f32
    %59 = vector.broadcast %cst_22 : f32 to vector<16x1xf32>
    %60 = arith.divf %58, %59 : vector<16x1xf32>
    %61 = vector.broadcast %53 : vector<16x1xf32> to vector<16x32xf32>
    %62 = arith.subf %49, %61 : vector<16x32xf32>
    %cst_23 = arith.constant 9.99999974E-6 : f32
    %63 = vector.broadcast %cst_23 : f32 to vector<16x1xf32>
    %64 = arith.addf %60, %63 : vector<16x1xf32>
    %65 = math.rsqrt %64 : vector<16x1xf32>
    %66 = vector.broadcast %65 : vector<16x1xf32> to vector<16x32xf32>
    %67 = arith.mulf %62, %66 : vector<16x32xf32>
    %68 = vector.broadcast %7 : vector<1x32xf32> to vector<16x32xf32>
    %69 = arith.mulf %67, %68 : vector<16x32xf32>
    %70 = vector.broadcast %8 : vector<1x32xf32> to vector<16x32xf32>
    %71 = arith.addf %69, %70 : vector<16x32xf32>
    %c0_24 = arith.constant 0 : index
    %c0_25 = arith.constant 0 : index
    %72 = vector.load %arg5[%c0_24, %c0_25] : memref<32x64xf32, #tpu.memory_space<vmem>>, vector<32x64xf32>
    %cst_26 = arith.constant dense<0.000000e+00> : vector<16x64xf32>
    %73 = tpu.matmul %71, %72, %cst_26 {dimension_numbers = #tpu.dot_dimension_numbers<[1], [0], [0], [1], [0, 0, 1, 1], [], []>} : vector<16x32xf32>, vector<32x64xf32>, vector<16x64xf32> -> vector<16x64xf32>
    %c0_27 = arith.constant 0 : index
    %c0_28 = arith.constant 0 : index
    %74 = vector.load %arg9[%c0_27, %c0_28] : memref<1x64xf32, #tpu.memory_space<vmem>>, vector<1x64xf32>
    %75 = vector.broadcast %74 : vector<1x64xf32> to vector<16x64xf32>
    %76 = arith.addf %73, %75 : vector<16x64xf32>
    %cst_29 = arith.constant 0.000000e+00 : f32
    %77 = vector.broadcast %cst_29 : f32 to vector<16x64xf32>
    %78 = arith.maximumf %76, %77 : vector<16x64xf32>
    %c0_30 = arith.constant 0 : index
    %c0_31 = arith.constant 0 : index
    %79 = vector.load %arg6[%c0_30, %c0_31] : memref<64x32xf32, #tpu.memory_space<vmem>>, vector<64x32xf32>
    %cst_32 = arith.constant dense<0.000000e+00> : vector<16x32xf32>
    %80 = tpu.matmul %78, %79, %cst_32 {dimension_numbers = #tpu.dot_dimension_numbers<[1], [0], [0], [1], [0, 0, 1, 1], [], []>} : vector<16x64xf32>, vector<64x32xf32>, vector<16x32xf32> -> vector<16x32xf32>
    %81 = vector.broadcast %6 : vector<1x32xf32> to vector<16x32xf32>
    %82 = arith.addf %80, %81 : vector<16x32xf32>
    %83 = arith.addf %71, %82 : vector<16x32xf32>
    %cst_33 = arith.constant dense<0.000000e+00> : vector<16xf32>
    %84 = vector.multi_reduction <add>, %83, %cst_33 [1] : vector<16x32xf32> to vector<16xf32>
    %85 = vector.shape_cast %84 : vector<16xf32> to vector<16x1xf32>
    %cst_34 = arith.constant 3.200000e+01 : f32
    %86 = vector.broadcast %cst_34 : f32 to vector<16x1xf32>
    %87 = arith.divf %85, %86 : vector<16x1xf32>
    %88 = vector.broadcast %87 : vector<16x1xf32> to vector<16x32xf32>
    %89 = arith.subf %83, %88 : vector<16x32xf32>
    %90 = arith.mulf %89, %89 : vector<16x32xf32>
    %cst_35 = arith.constant dense<0.000000e+00> : vector<16xf32>
    %91 = vector.multi_reduction <add>, %90, %cst_35 [1] : vector<16x32xf32> to vector<16xf32>
    %92 = vector.shape_cast %91 : vector<16xf32> to vector<16x1xf32>
    %cst_36 = arith.constant 3.200000e+01 : f32
    %93 = vector.broadcast %cst_36 : f32 to vector<16x1xf32>
    %94 = arith.divf %92, %93 : vector<16x1xf32>
    %95 = vector.broadcast %87 : vector<16x1xf32> to vector<16x32xf32>
    %96 = arith.subf %83, %95 : vector<16x32xf32>
    %cst_37 = arith.constant 9.99999974E-6 : f32
    %97 = vector.broadcast %cst_37 : f32 to vector<16x1xf32>
    %98 = arith.addf %94, %97 : vector<16x1xf32>
    %99 = math.rsqrt %98 : vector<16x1xf32>
    %100 = vector.broadcast %99 : vector<16x1xf32> to vector<16x32xf32>
    %101 = arith.mulf %96, %100 : vector<16x32xf32>
    %102 = vector.broadcast %9 : vector<1x32xf32> to vector<16x32xf32>
    %103 = arith.mulf %101, %102 : vector<16x32xf32>
    %104 = vector.broadcast %10 : vector<1x32xf32> to vector<16x32xf32>
    %105 = arith.addf %103, %104 : vector<16x32xf32>
    %c0_38 = arith.constant 0 : index
    %c0_39 = arith.constant 0 : index
    %106 = vector.load %arg10[%c0_38, %c0_39] : memref<16x32xf32, #tpu.memory_space<vmem>>, vector<16x32xf32>
    tpu.vector_store %arg10[%c0_38, %c0_39], %105 {strides = array<i32>} : memref<16x32xf32, #tpu.memory_space<vmem>>, vector<16x32xf32>,
    return
  }
}

</mosaic_0001>

<llo_original>
// kernel: transformer_encoder_layer.1
$region0: #{transformer_encoder_layer.1}
  #allocation0 [shape = 'u32[]', space=smem, size = 0x4, offset = 0x4, fixed_abs, tag = 'smem constant byte address 0x4 - core index']
  #allocation1 [shape = 'u32[144,128]{1,0:T(1,128)}', space=vmem, size = 0x12000, scoped, tag = 'internal scratch']
  %s0 = inlined_call_operand.vmem [shape: f32[16,32], index: 0, kind: input, shape index: {}]
  %s1 = inlined_call_operand.vmem [shape: f32[16,32], index: 1, kind: input, shape index: {}]
  %s2 = inlined_call_operand.vmem [shape: f32[32,64], index: 2, kind: input, shape index: {}]
  %s3 = inlined_call_operand.vmem [shape: f32[32,32], index: 3, kind: input, shape index: {}]
  %s4 = inlined_call_operand.vmem [shape: f32[32,32], index: 4, kind: input, shape index: {}]
  %s5 = inlined_call_operand.vmem [shape: f32[32,64], index: 5, kind: input, shape index: {}]
  %s6 = inlined_call_operand.vmem [shape: f32[64,32], index: 6, kind: input, shape index: {}]
  %s7 = inlined_call_operand.vmem [shape: f32[1,64], index: 7, kind: input, shape index: {}]
  %s8 = inlined_call_operand.vmem [shape: f32[7,32], index: 8, kind: input, shape index: {}]
  %s9 = inlined_call_operand.vmem [shape: f32[1,64], index: 9, kind: input, shape index: {}]
  %s10 = inlined_call_operand.vmem [shape: f32[16,32], index: 10, kind: output, shape index: {}]
  %s11 = sld [smem:[#allocation0]]
  $region50: #{transformer_encoder_layer.1} parent=0
    _
  %s13 = ssub.s32 1, %s11
  %s14 = scalar_select 0, %s13, %s11
  // Predicated region
  $region2: #{transformer_encoder_layer.1} parent=0 // pred_check
    _
  $region3: #{transformer_encoder_layer.1} parent=0 // pred_check_branch
    %16 = sbr.rel (0) target = $region5
  $region4: #{transformer_encoder_layer.1} parent=0 // pred_region
    _
  $region5: #{transformer_encoder_layer.1} parent=0 // pred_fallthru
    _
  // Predicated region
  $region6: #{transformer_encoder_layer.1} parent=0 // pred_check
    _
  $region7: #{transformer_encoder_layer.1} parent=0 // pred_check_branch
    %18 = sbr.rel (0) target = $region9
  $region8: #{transformer_encoder_layer.1} parent=0 // pred_region
    _
  $region9: #{transformer_encoder_layer.1} parent=0 // pred_fallthru
    _
  // Predicated region
  $region10: #{transformer_encoder_layer.1} parent=0 // pred_check
    _
  $region11: #{transformer_encoder_layer.1} parent=0 // pred_check_branch
    %20 = sbr.rel (0) target = $region13
  $region12: #{transformer_encoder_layer.1} parent=0 // pred_region
    _
  $region13: #{transformer_encoder_layer.1} parent=0 // pred_fallthru
    _
  // Predicated region
  $region14: #{transformer_encoder_layer.1} parent=0 // pred_check
    _
  $region15: #{transformer_encoder_layer.1} parent=0 // pred_check_branch
    %22 = sbr.rel (0) target = $region17
  $region16: #{transformer_encoder_layer.1} parent=0 // pred_region
    _
  $region17: #{transformer_encoder_layer.1} parent=0 // pred_fallthru
    _
  // Predicated region
  $region18: #{transformer_encoder_layer.1} parent=0 // pred_check
    _
  $region19: #{transformer_encoder_layer.1} parent=0 // pred_check_branch
    %24 = sbr.rel (0) target = $region21
  $region20: #{transformer_encoder_layer.1} parent=0 // pred_region
    _
  $region21: #{transformer_encoder_layer.1} parent=0 // pred_fallthru
    _
  // Predicated region
  $region22: #{transformer_encoder_layer.1} parent=0 // pred_check
    _
  $region23: #{transformer_encoder_layer.1} parent=0 // pred_check_branch
    %26 = sbr.rel (0) target = $region25
  $region24: #{transformer_encoder_layer.1} parent=0 // pred_region
    _
  $region25: #{transformer_encoder_layer.1} parent=0 // pred_fallthru
    _
  // Predicated region
  $region26: #{transformer_encoder_layer.1} parent=0 // pred_check
    _
  $region27: #{transformer_encoder_layer.1} parent=0 // pred_check_branch
    %28 = sbr.rel (0) target = $region29
  $region28: #{transformer_encoder_layer.1} parent=0 // pred_region
    _
  $region29: #{transformer_encoder_layer.1} parent=0 // pred_fallthru
    _
  // Predicated region
  $region30: #{transformer_encoder_layer.1} parent=0 // pred_check
    _
  $region31: #{transformer_encoder_layer.1} parent=0 // pred_check_branch
    %30 = sbr.rel (0) target = $region33
  $region32: #{transformer_encoder_layer.1} parent=0 // pred_region
    _
  $region33: #{transformer_encoder_layer.1} parent=0 // pred_fallthru
    _
  // Predicated region
  $region34: #{transformer_encoder_layer.1} parent=0 // pred_check
    _
  $region35: #{transformer_encoder_layer.1} parent=0 // pred_check_branch
    %32 = sbr.rel (0) target = $region37
  $region36: #{transformer_encoder_layer.1} parent=0 // pred_region
    _
  $region37: #{transformer_encoder_layer.1} parent=0 // pred_fallthru
    _
  // Predicated region
  $region38: #{transformer_encoder_layer.1} parent=0 // pred_check
    _
  $region39: #{transformer_encoder_layer.1} parent=0 // pred_check_branch
    %34 = sbr.rel (0) target = $region41
  $region40: #{transformer_encoder_layer.1} parent=0 // pred_region
    _
  $region41: #{transformer_encoder_layer.1} parent=0 // pred_fallthru
    _
  %v35 = vld [vmem:[%s0] sm:$0xff]
  %v36 = vld [vmem:[%s0 + $0x8] sm:$0xff]
  %v37 = vld [vmem:[%s1] sm:$0xff]
  %v38 = vld [vmem:[%s1 + $0x8] sm:$0xff]
  %v39 = vadd.f32 %v35, %v37
  %v40 = vadd.f32 %v36, %v38
  %v41 = vld [vmem:[%s8] sm:$0x7f]
  %v42 = vld [vmem:[%s2] sm:$0xff]
  %v43 = vld [vmem:[%s2 + $0x8] sm:$0xff]
  %v44 = vld [vmem:[%s2 + $0x10] sm:$0xff]
  %v45 = vld [vmem:[%s2 + $0x18] sm:$0xff]
  %v46 = vld [vmem:[%s7] sm:$0x1]
  %v48 = vlaneseq
  %v49 = vshrl.u32 %v48, 7
  %v50 = vsub.s32 0, %v49
  %v51 = vrot.slane %v46, %v50
  %vm53 = vcmask 261120
  %v55 = vsel %vm53, %v39, 0
  %v58 = vsel %vm53, %v40, 0
  %60 = vmatprep.subr.mxu0 0.0
  %61 = vmatpush1.msra.mxu0 %v42
  %62 = vmatprep.subr.mxu0 0.0
  %63 = vmatpush1.msra.mxu0 %v43
  %64 = vmatprep.subr.mxu0 0.0
  %65 = vmatpush1.msra.mxu0 %v44
  %66 = vmatprep.subr.mxu0 0.0
  %67 = vmatpush1.msra.mxu0 %v45
  %68 = vmatprep.subr.mxu0 0.0
  %69 = vmatpush1.msra.mxu0 0.0
  %70 = vmatprep.subr.mxu0 0.0
  %71 = vmatpush1.msra.mxu0 0.0
  %72 = vmatprep.subr.mxu0 0.0
  %73 = vmatpush1.msra.mxu0 0.0
  %74 = vmatprep.subr.mxu0 0.0
  %75 = vmatpush1.msra.mxu0 0.0
  %76 = vmatprep.subr.mxu0 0.0
  %77 = vmatpush1.msra.mxu0 0.0
  %78 = vmatprep.subr.mxu0 0.0
  %79 = vmatpush1.msra.mxu0 0.0
  %80 = vmatprep.subr.mxu0 0.0
  %81 = vmatpush1.msra.mxu0 0.0
  %82 = vmatprep.subr.mxu0 0.0
  %83 = vmatpush1.msra.mxu0 0.0
  %84 = vmatprep.subr.mxu0 0.0
  %85 = vmatpush1.msra.mxu0 0.0
  %86 = vmatprep.subr.mxu0 0.0
  %87 = vmatpush1.msra.mxu0 0.0
  %88 = vmatprep.subr.mxu0 0.0
  %89 = vmatpush1.msra.mxu0 0.0
  %90 = vmatprep.subr.mxu0 0.0
  %91 = vmatpush1.msra.mxu0 0.0
  %92 = vmatprep.subr.mxu0 0.0
  %93 = vmatpush1.msra.mxu0 0.0
  %94 = vmatprep.subr.mxu0 0.0
  %95 = vmatpush1.msra.mxu0 0.0
  %96 = vmatprep.subr.mxu0 0.0
  %97 = vmatpush1.msra.mxu0 0.0
  %98 = vmatprep.subr.mxu0 0.0
  %99 = vmatpush1.msra.mxu0 0.0
  %100 = vmatprep.subr.mxu0 0.0
  %101 = vmatpush1.msra.mxu0 0.0
  %102 = vmatprep.subr.mxu0 0.0
  %103 = vmatpush1.msra.mxu0 0.0
  %104 = vmatprep.subr.mxu0 0.0
  %105 = vmatpush1.msra.mxu0 0.0
  %106 = vmatprep.subr.mxu0 0.0
  %107 = vmatpush1.msra.mxu0 0.0
  %108 = vmatprep.subr.mxu0 0.0
  %109 = vmatpush1.msra.mxu0 0.0
  %110 = vmatprep.subr.mxu0 0.0
  %111 = vmatpush1.msra.mxu0 0.0
  %112 = vmatprep.subr.mxu0 0.0
  %113 = vmatpush1.msra.mxu0 0.0
  %114 = vmatprep.subr.mxu0 0.0
  %115 = vmatpush1.msra.mxu0 0.0
  %116 = vmatprep.subr.mxu0 0.0
  %117 = vmatpush1.msra.mxu0 0.0
  %118 = vmatprep.subr.mxu0 0.0
  %119 = vmatpush1.msra.mxu0 0.0
  %120 = vmatprep.subr.mxu0 0.0
  %121 = vmatpush1.msra.mxu0 0.0
  %122 = vmatprep.subr.mxu0 0.0
  %123 = vmatpush1.msra.mxu0 0.0
  %124 = vmatprep.mubr.f32.mxu0 0.0
  %125 = vmatmul.mubr.f32.gmra.mrb[0].mxu0 %v55
  %v126 = vpop.f32.mrb[0].mxu0
  %v127 = vadd.f32 %v51, %v126
  %v128 = vpop.f32.mrb[0].mxu0
  %129 = vmatprep.mubr.f32.mxu0 0.0
  %130 = vmatmul.mubr.f32.gmra.mrb[0].mxu0 %v58
  %v131 = vpop.f32.mrb[0].mxu0
  %v132 = vadd.f32 %v51, %v131
  %v133 = vpop.f32.mrb[0].mxu0
  %134 = vdwg.mxu0
  %v135 = vld [vmem:[%s3] sm:$0xff]
  %v136 = vld [vmem:[%s3 + $0x8] sm:$0xff]
  %v137 = vld [vmem:[%s3 + $0x10] sm:$0xff]
  %v138 = vld [vmem:[%s3 + $0x18] sm:$0xff]
  %v139 = vlaneseq
  %v140 = vshrl.u32 %v139, 7
  %v141 = vsub.s32 0, %v140
  %v142 = vrot.slane %v41, %v141
  %v144 = vsel %vm53, %v35, 0
  %v147 = vsel %vm53, %v36, 0
  %149 = vmatprep.subr.mxu0 0.0
  %150 = vmatpush1.msra.mxu0 %v135
  %151 = vmatprep.subr.mxu0 0.0
  %152 = vmatpush1.msra.mxu0 %v136
  %153 = vmatprep.subr.mxu0 0.0
  %154 = vmatpush1.msra.mxu0 %v137
  %155 = vmatprep.subr.mxu0 0.0
  %156 = vmatpush1.msra.mxu0 %v138
  %157 = vmatprep.subr.mxu0 0.0
  %158 = vmatpush1.msra.mxu0 0.0
  %159 = vmatprep.subr.mxu0 0.0
  %160 = vmatpush1.msra.mxu0 0.0
  %161 = vmatprep.subr.mxu0 0.0
  %162 = vmatpush1.msra.mxu0 0.0
  %163 = vmatprep.subr.mxu0 0.0
  %164 = vmatpush1.msra.mxu0 0.0
  %165 = vmatprep.subr.mxu0 0.0
  %166 = vmatpush1.msra.mxu0 0.0
  %167 = vmatprep.subr.mxu0 0.0
  %168 = vmatpush1.msra.mxu0 0.0
  %169 = vmatprep.subr.mxu0 0.0
  %170 = vmatpush1.msra.mxu0 0.0
  %171 = vmatprep.subr.mxu0 0.0
  %172 = vmatpush1.msra.mxu0 0.0
  %173 = vmatprep.subr.mxu0 0.0
  %174 = vmatpush1.msra.mxu0 0.0
  %175 = vmatprep.subr.mxu0 0.0
  %176 = vmatpush1.msra.mxu0 0.0
  %177 = vmatprep.subr.mxu0 0.0
  %178 = vmatpush1.msra.mxu0 0.0
  %179 = vmatprep.subr.mxu0 0.0
  %180 = vmatpush1.msra.mxu0 0.0
  %181 = vmatprep.subr.mxu0 0.0
  %182 = vmatpush1.msra.mxu0 0.0
  %183 = vmatprep.subr.mxu0 0.0
  %184 = vmatpush1.msra.mxu0 0.0
  %185 = vmatprep.subr.mxu0 0.0
  %186 = vmatpush1.msra.mxu0 0.0
  %187 = vmatprep.subr.mxu0 0.0
  %188 = vmatpush1.msra.mxu0 0.0
  %189 = vmatprep.subr.mxu0 0.0
  %190 = vmatpush1.msra.mxu0 0.0
  %191 = vmatprep.subr.mxu0 0.0
  %192 = vmatpush1.msra.mxu0 0.0
  %193 = vmatprep.subr.mxu0 0.0
  %194 = vmatpush1.msra.mxu0 0.0
  %195 = vmatprep.subr.mxu0 0.0
  %196 = vmatpush1.msra.mxu0 0.0
  %197 = vmatprep.subr.mxu0 0.0
  %198 = vmatpush1.msra.mxu0 0.0
  %199 = vmatprep.subr.mxu0 0.0
  %200 = vmatpush1.msra.mxu0 0.0
  %201 = vmatprep.subr.mxu0 0.0
  %202 = vmatpush1.msra.mxu0 0.0
  %203 = vmatprep.subr.mxu0 0.0
  %204 = vmatpush1.msra.mxu0 0.0
  %205 = vmatprep.subr.mxu0 0.0
  %206 = vmatpush1.msra.mxu0 0.0
  %207 = vmatprep.subr.mxu0 0.0
  %208 = vmatpush1.msra.mxu0 0.0
  %209 = vmatprep.subr.mxu0 0.0
  %210 = vmatpush1.msra.mxu0 0.0
  %211 = vmatprep.subr.mxu0 0.0
  %212 = vmatpush1.msra.mxu0 0.0
  %213 = vmatprep.mubr.f32.mxu0 0.0
  %214 = vmatmul.mubr.f32.gmra.mrb[0].mxu0 %v144
  %v215 = vpop.f32.mrb[0].mxu0
  %v216 = vadd.f32 %v142, %v215
  %v217 = vpop.f32.mrb[0].mxu0
  %218 = vmatprep.mubr.f32.mxu0 0.0
  %219 = vmatmul.mubr.f32.gmra.mrb[0].mxu0 %v147
  %v220 = vpop.f32.mrb[0].mxu0
  %v221 = vadd.f32 %v142, %v220
  %v222 = vpop.f32.mrb[0].mxu0
  %223 = vdwg.mxu0
  %226 = vrot.lane.b32.xlu0 %v127, 120
  %v227 = vpop.permute.xlu0 %226
  %228 = vrot.lane.b32.xlu0 %v132, 120
  %v229 = vpop.permute.xlu0 %228
  %232 = vrot.lane.b32.xlu0 %v127, 112
  %v233 = vpop.permute.xlu0 %232
  %234 = vrot.lane.b32.xlu0 %v132, 112
  %v235 = vpop.permute.xlu0 %234
  %238 = vrot.lane.b32.xlu0 %v127, 104
  %v239 = vpop.permute.xlu0 %238
  %240 = vrot.lane.b32.xlu0 %v132, 104
  %v241 = vpop.permute.xlu0 %240
  %244 = vrot.lane.b32.xlu0 %v127, 96
  %v245 = vpop.permute.xlu0 %244
  %246 = vrot.lane.b32.xlu0 %v132, 96
  %v247 = vpop.permute.xlu0 %246
  %250 = vrot.lane.b32.xlu0 %v127, 88
  %v251 = vpop.permute.xlu0 %250
  %252 = vrot.lane.b32.xlu0 %v132, 88
  %v253 = vpop.permute.xlu0 %252
  %256 = vrot.lane.b32.xlu0 %v127, 80
  %v257 = vpop.permute.xlu0 %256
  %258 = vrot.lane.b32.xlu0 %v132, 80
  %v259 = vpop.permute.xlu0 %258
  %262 = vrot.lane.b32.xlu0 %v127, 72
  %v263 = vpop.permute.xlu0 %262
  %264 = vrot.lane.b32.xlu0 %v132, 72
  %v265 = vpop.permute.xlu0 %264
  %v268 = vcombine.low %v127, %v233
  %v269 = vcombine.high %v127, %v233
  %v271 = vunpack.c.l.s4 1983009808
  %v272 = vunpack.c.0.s8 %v271
  %v273 = vlaneseq
  %v274 = vshrl.u32 %v273, 7
  %v275 = vsub.s32 %v272, %v274
  %v276 = vrot.slane %v268, %v275
  %v278 = vunpack.c.l.s4 1983009808
  %v279 = vunpack.c.0.s8 %v278
  %v280 = vlaneseq
  %v281 = vshrl.u32 %v280, 7
  %v282 = vsub.s32 %v279, %v281
  %v283 = vrot.slane %v269, %v282
  %v284 = vcombine.low %v227, %v239
  %v285 = vcombine.high %v227, %v239
  %v287 = vunpack.c.l.s4 1983009808
  %v288 = vunpack.c.0.s8 %v287
  %v289 = vlaneseq
  %v290 = vshrl.u32 %v289, 7
  %v291 = vsub.s32 %v288, %v290
  %v292 = vrot.slane %v284, %v291
  %v294 = vunpack.c.l.s4 1983009808
  %v295 = vunpack.c.0.s8 %v294
  %v296 = vlaneseq
  %v297 = vshrl.u32 %v296, 7
  %v298 = vsub.s32 %v295, %v297
  %v299 = vrot.slane %v285, %v298
  %v300 = vcombine.low %v245, %v257
  %v301 = vcombine.high %v245, %v257
  %v303 = vunpack.c.l.s4 1983009808
  %v304 = vunpack.c.0.s8 %v303
  %v305 = vlaneseq
  %v306 = vshrl.u32 %v305, 7
  %v307 = vsub.s32 %v304, %v306
  %v308 = vrot.slane %v300, %v307
  %v310 = vunpack.c.l.s4 1983009808
  %v311 = vunpack.c.0.s8 %v310
  %v312 = vlaneseq
  %v313 = vshrl.u32 %v312, 7
  %v314 = vsub.s32 %v311, %v313
  %v315 = vrot.slane %v301, %v314
  %v316 = vcombine.low %v251, %v263
  %v317 = vcombine.high %v251, %v263
  %v319 = vunpack.c.l.s4 1983009808
  %v320 = vunpack.c.0.s8 %v319
  %v321 = vlaneseq
  %v322 = vshrl.u32 %v321, 7
  %v323 = vsub.s32 %v320, %v322
  %v324 = vrot.slane %v316, %v323
  %v326 = vunpack.c.l.s4 1983009808
  %v327 = vunpack.c.0.s8 %v326
  %v328 = vlaneseq
  %v329 = vshrl.u32 %v328, 7
  %v330 = vsub.s32 %v327, %v329
  %v331 = vrot.slane %v317, %v330
  %v332 = vcombine.low %v276, %v292
  %v333 = vcombine.high %v276, %v292
  %v335 = vunpack.c.l.s4 1934713408
  %v336 = vunpack.c.0.s8 %v335
  %v337 = vlaneseq
  %v338 = vshrl.u32 %v337, 7
  %v339 = vsub.s32 %v336, %v338
  %v340 = vrot.slane %v332, %v339
  %v342 = vunpack.c.l.s4 1934713408
  %v343 = vunpack.c.0.s8 %v342
  %v344 = vlaneseq
  %v345 = vshrl.u32 %v344, 7
  %v346 = vsub.s32 %v343, %v345
  %v347 = vrot.slane %v333, %v346
  %v348 = vcombine.low %v283, %v299
  %v349 = vcombine.high %v283, %v299
  %v351 = vunpack.c.l.s4 1934713408
  %v352 = vunpack.c.0.s8 %v351
  %v353 = vlaneseq
  %v354 = vshrl.u32 %v353, 7
  %v355 = vsub.s32 %v352, %v354
  %v356 = vrot.slane %v348, %v355
  %v358 = vunpack.c.l.s4 1934713408
  %v359 = vunpack.c.0.s8 %v358
  %v360 = vlaneseq
  %v361 = vshrl.u32 %v360, 7
  %v362 = vsub.s32 %v359, %v361
  %v363 = vrot.slane %v349, %v362
  %v364 = vcombine.low %v308, %v324
  %v365 = vcombine.high %v308, %v324
  %v367 = vunpack.c.l.s4 1934713408
  %v368 = vunpack.c.0.s8 %v367
  %v369 = vlaneseq
  %v370 = vshrl.u32 %v369, 7
  %v371 = vsub.s32 %v368, %v370
  %v372 = vrot.slane %v364, %v371
  %v374 = vunpack.c.l.s4 1934713408
  %v375 = vunpack.c.0.s8 %v374
  %v376 = vlaneseq
  %v377 = vshrl.u32 %v376, 7
  %v378 = vsub.s32 %v375, %v377
  %v379 = vrot.slane %v365, %v378
  %v380 = vcombine.low %v315, %v331
  %v381 = vcombine.high %v315, %v331
  %v383 = vunpack.c.l.s4 1934713408
  %v384 = vunpack.c.0.s8 %v383
  %v385 = vlaneseq
  %v386 = vshrl.u32 %v385, 7
  %v387 = vsub.s32 %v384, %v386
  %v388 = vrot.slane %v380, %v387
  %v390 = vunpack.c.l.s4 1934713408
  %v391 = vunpack.c.0.s8 %v390
  %v392 = vlaneseq
  %v393 = vshrl.u32 %v392, 7
  %v394 = vsub.s32 %v391, %v393
  %v395 = vrot.slane %v381, %v394
  %v396 = vcombine.low %v340, %v372
  %v397 = vcombine.high %v340, %v372
  %v398 = vcombine.low %v347, %v379
  %v399 = vcombine.high %v347, %v379
  %v400 = vcombine.low %v356, %v388
  %v401 = vcombine.high %v356, %v388
  %v402 = vcombine.low %v363, %v395
  %v403 = vcombine.high %v363, %v395
  %v404 = vcombine.low %v132, %v235
  %v405 = vcombine.high %v132, %v235
  %v407 = vunpack.c.l.s4 1983009808
  %v408 = vunpack.c.0.s8 %v407
  %v409 = vlaneseq
  %v410 = vshrl.u32 %v409, 7
  %v411 = vsub.s32 %v408, %v410
  %v412 = vrot.slane %v404, %v411
  %v414 = vunpack.c.l.s4 1983009808
  %v415 = vunpack.c.0.s8 %v414
  %v416 = vlaneseq
  %v417 = vshrl.u32 %v416, 7
  %v418 = vsub.s32 %v415, %v417
  %v419 = vrot.slane %v405, %v418
  %v420 = vcombine.low %v229, %v241
  %v421 = vcombine.high %v229, %v241
  %v423 = vunpack.c.l.s4 1983009808
  %v424 = vunpack.c.0.s8 %v423
  %v425 = vlaneseq
  %v426 = vshrl.u32 %v425, 7
  %v427 = vsub.s32 %v424, %v426
  %v428 = vrot.slane %v420, %v427
  %v430 = vunpack.c.l.s4 1983009808
  %v431 = vunpack.c.0.s8 %v430
  %v432 = vlaneseq
  %v433 = vshrl.u32 %v432, 7
  %v434 = vsub.s32 %v431, %v433
  %v435 = vrot.slane %v421, %v434
  %v436 = vcombine.low %v247, %v259
  %v437 = vcombine.high %v247, %v259
  %v439 = vunpack.c.l.s4 1983009808
  %v440 = vunpack.c.0.s8 %v439
  %v441 = vlaneseq
  %v442 = vshrl.u32 %v441, 7
  %v443 = vsub.s32 %v440, %v442
  %v444 = vrot.slane %v436, %v443
  %v446 = vunpack.c.l.s4 1983009808
  %v447 = vunpack.c.0.s8 %v446
  %v448 = vlaneseq
  %v449 = vshrl.u32 %v448, 7
  %v450 = vsub.s32 %v447, %v449
  %v451 = vrot.slane %v437, %v450
  %v452 = vcombine.low %v253, %v265
  %v453 = vcombine.high %v253, %v265
  %v455 = vunpack.c.l.s4 1983009808
  %v456 = vunpack.c.0.s8 %v455
  %v457 = vlaneseq
  %v458 = vshrl.u32 %v457, 7
  %v459 = vsub.s32 %v456, %v458
  %v460 = vrot.slane %v452, %v459
  %v462 = vunpack.c.l.s4 1983009808
  %v463 = vunpack.c.0.s8 %v462
  %v464 = vlaneseq
  %v465 = vshrl.u32 %v464, 7
  %v466 = vsub.s32 %v463, %v465
  %v467 = vrot.slane %v453, %v466
  %v468 = vcombine.low %v412, %v428
  %v469 = vcombine.high %v412, %v428
  %v471 = vunpack.c.l.s4 1934713408
  %v472 = vunpack.c.0.s8 %v471
  %v473 = vlaneseq
  %v474 = vshrl.u32 %v473, 7
  %v475 = vsub.s32 %v472, %v474
  %v476 = vrot.slane %v468, %v475
  %v478 = vunpack.c.l.s4 1934713408
  %v479 = vunpack.c.0.s8 %v478
  %v480 = vlaneseq
  %v481 = vshrl.u32 %v480, 7
  %v482 = vsub.s32 %v479, %v481
  %v483 = vrot.slane %v469, %v482
  %v484 = vcombine.low %v419, %v435
  %v485 = vcombine.high %v419, %v435
  %v487 = vunpack.c.l.s4 1934713408
  %v488 = vunpack.c.0.s8 %v487
  %v489 = vlaneseq
  %v490 = vshrl.u32 %v489, 7
  %v491 = vsub.s32 %v488, %v490
  %v492 = vrot.slane %v484, %v491
  %v494 = vunpack.c.l.s4 1934713408
  %v495 = vunpack.c.0.s8 %v494
  %v496 = vlaneseq
  %v497 = vshrl.u32 %v496, 7
  %v498 = vsub.s32 %v495, %v497
  %v499 = vrot.slane %v485, %v498
  %v500 = vcombine.low %v444, %v460
  %v501 = vcombine.high %v444, %v460
  %v503 = vunpack.c.l.s4 1934713408
  %v504 = vunpack.c.0.s8 %v503
  %v505 = vlaneseq
  %v506 = vshrl.u32 %v505, 7
  %v507 = vsub.s32 %v504, %v506
  %v508 = vrot.slane %v500, %v507
  %v510 = vunpack.c.l.s4 1934713408
  %v511 = vunpack.c.0.s8 %v510
  %v512 = vlaneseq
  %v513 = vshrl.u32 %v512, 7
  %v514 = vsub.s32 %v511, %v513
  %v515 = vrot.slane %v501, %v514
  %v516 = vcombine.low %v451, %v467
  %v517 = vcombine.high %v451, %v467
  %v519 = vunpack.c.l.s4 1934713408
  %v520 = vunpack.c.0.s8 %v519
  %v521 = vlaneseq
  %v522 = vshrl.u32 %v521, 7
  %v523 = vsub.s32 %v520, %v522
  %v524 = vrot.slane %v516, %v523
  %v526 = vunpack.c.l.s4 1934713408
  %v527 = vunpack.c.0.s8 %v526
  %v528 = vlaneseq
  %v529 = vshrl.u32 %v528, 7
  %v530 = vsub.s32 %v527, %v529
  %v531 = vrot.slane %v517, %v530
  %v532 = vcombine.low %v476, %v508
  %v533 = vcombine.high %v476, %v508
  %v534 = vcombine.low %v483, %v515
  %v535 = vcombine.high %v483, %v515
  %v536 = vcombine.low %v492, %v524
  %v537 = vcombine.high %v492, %v524
  %v538 = vcombine.low %v499, %v531
  %v539 = vcombine.high %v499, %v531
  %v540 = vcombine.low %v396, %v398
  %v541 = vcombine.high %v396, %v398
  %v543 = vunpack.c.l.s4 1983009808
  %v544 = vunpack.c.0.s8 %v543
  %v545 = vlaneseq
  %v546 = vshrl.u32 %v545, 7
  %v547 = vsub.s32 %v544, %v546
  %v548 = vrot.slane %v540, %v547
  %v550 = vunpack.c.l.s4 1983009808
  %v551 = vunpack.c.0.s8 %v550
  %v552 = vlaneseq
  %v553 = vshrl.u32 %v552, 7
  %v554 = vsub.s32 %v551, %v553
  %v555 = vrot.slane %v541, %v554
  %v556 = vcombine.low %v397, %v399
  %v557 = vcombine.high %v397, %v399
  %v559 = vunpack.c.l.s4 1983009808
  %v560 = vunpack.c.0.s8 %v559
  %v561 = vlaneseq
  %v562 = vshrl.u32 %v561, 7
  %v563 = vsub.s32 %v560, %v562
  %v564 = vrot.slane %v556, %v563
  %v566 = vunpack.c.l.s4 1983009808
  %v567 = vunpack.c.0.s8 %v566
  %v568 = vlaneseq
  %v569 = vshrl.u32 %v568, 7
  %v570 = vsub.s32 %v567, %v569
  %v571 = vrot.slane %v557, %v570
  %v572 = vcombine.low %v400, %v402
  %v573 = vcombine.high %v400, %v402
  %v575 = vunpack.c.l.s4 1983009808
  %v576 = vunpack.c.0.s8 %v575
  %v577 = vlaneseq
  %v578 = vshrl.u32 %v577, 7
  %v579 = vsub.s32 %v576, %v578
  %v580 = vrot.slane %v572, %v579
  %v582 = vunpack.c.l.s4 1983009808
  %v583 = vunpack.c.0.s8 %v582
  %v584 = vlaneseq
  %v585 = vshrl.u32 %v584, 7
  %v586 = vsub.s32 %v583, %v585
  %v587 = vrot.slane %v573, %v586
  %v588 = vcombine.low %v401, %v403
  %v589 = vcombine.high %v401, %v403
  %v591 = vunpack.c.l.s4 1983009808
  %v592 = vunpack.c.0.s8 %v591
  %v593 = vlaneseq
  %v594 = vshrl.u32 %v593, 7
  %v595 = vsub.s32 %v592, %v594
  %v596 = vrot.slane %v588, %v595
  %v598 = vunpack.c.l.s4 1983009808
  %v599 = vunpack.c.0.s8 %v598
  %v600 = vlaneseq
  %v601 = vshrl.u32 %v600, 7
  %v602 = vsub.s32 %v599, %v601
  %v603 = vrot.slane %v589, %v602
  %v604 = vcombine.low %v548, %v564
  %v605 = vcombine.high %v548, %v564
  %v607 = vunpack.c.l.s4 1934713408
  %v608 = vunpack.c.0.s8 %v607
  %v609 = vlaneseq
  %v610 = vshrl.u32 %v609, 7
  %v611 = vsub.s32 %v608, %v610
  %v612 = vrot.slane %v604, %v611
  %v614 = vunpack.c.l.s4 1934713408
  %v615 = vunpack.c.0.s8 %v614
  %v616 = vlaneseq
  %v617 = vshrl.u32 %v616, 7
  %v618 = vsub.s32 %v615, %v617
  %v619 = vrot.slane %v605, %v618
  %v620 = vcombine.low %v555, %v571
  %v621 = vcombine.high %v555, %v571
  %v623 = vunpack.c.l.s4 1934713408
  %v624 = vunpack.c.0.s8 %v623
  %v625 = vlaneseq
  %v626 = vshrl.u32 %v625, 7
  %v627 = vsub.s32 %v624, %v626
  %v628 = vrot.slane %v620, %v627
  %v630 = vunpack.c.l.s4 1934713408
  %v631 = vunpack.c.0.s8 %v630
  %v632 = vlaneseq
  %v633 = vshrl.u32 %v632, 7
  %v634 = vsub.s32 %v631, %v633
  %v635 = vrot.slane %v621, %v634
  %v636 = vcombine.low %v580, %v596
  %v637 = vcombine.high %v580, %v596
  %v639 = vunpack.c.l.s4 1934713408
  %v640 = vunpack.c.0.s8 %v639
  %v641 = vlaneseq
  %v642 = vshrl.u32 %v641, 7
  %v643 = vsub.s32 %v640, %v642
  %v644 = vrot.slane %v636, %v643
  %v646 = vunpack.c.l.s4 1934713408
  %v647 = vunpack.c.0.s8 %v646
  %v648 = vlaneseq
  %v649 = vshrl.u32 %v648, 7
  %v650 = vsub.s32 %v647, %v649
  %v651 = vrot.slane %v637, %v650
  %v652 = vcombine.low %v587, %v603
  %v653 = vcombine.high %v587, %v603
  %v655 = vunpack.c.l.s4 1934713408
  %v656 = vunpack.c.0.s8 %v655
  %v657 = vlaneseq
  %v658 = vshrl.u32 %v657, 7
  %v659 = vsub.s32 %v656, %v658
  %v660 = vrot.slane %v652, %v659
  %v662 = vunpack.c.l.s4 1934713408
  %v663 = vunpack.c.0.s8 %v662
  %v664 = vlaneseq
  %v665 = vshrl.u32 %v664, 7
  %v666 = vsub.s32 %v663, %v665
  %v667 = vrot.slane %v653, %v666
  %v668 = vcombine.low %v612, %v644
  %v669 = vcombine.high %v612, %v644
  %v670 = vcombine.low %v619, %v651
  %v671 = vcombine.high %v619, %v651
  %v672 = vcombine.low %v628, %v660
  %v673 = vcombine.high %v628, %v660
  %v674 = vcombine.low %v635, %v667
  %v675 = vcombine.high %v635, %v667
  %v676 = vcombine.low %v532, %v534
  %v677 = vcombine.high %v532, %v534
  %v679 = vunpack.c.l.s4 1983009808
  %v680 = vunpack.c.0.s8 %v679
  %v681 = vlaneseq
  %v682 = vshrl.u32 %v681, 7
  %v683 = vsub.s32 %v680, %v682
  %v684 = vrot.slane %v676, %v683
  %v686 = vunpack.c.l.s4 1983009808
  %v687 = vunpack.c.0.s8 %v686
  %v688 = vlaneseq
  %v689 = vshrl.u32 %v688, 7
  %v690 = vsub.s32 %v687, %v689
  %v691 = vrot.slane %v677, %v690
  %v692 = vcombine.low %v533, %v535
  %v693 = vcombine.high %v533, %v535
  %v695 = vunpack.c.l.s4 1983009808
  %v696 = vunpack.c.0.s8 %v695
  %v697 = vlaneseq
  %v698 = vshrl.u32 %v697, 7
  %v699 = vsub.s32 %v696, %v698
  %v700 = vrot.slane %v692, %v699
  %v702 = vunpack.c.l.s4 1983009808
  %v703 = vunpack.c.0.s8 %v702
  %v704 = vlaneseq
  %v705 = vshrl.u32 %v704, 7
  %v706 = vsub.s32 %v703, %v705
  %v707 = vrot.slane %v693, %v706
  %v708 = vcombine.low %v536, %v538
  %v709 = vcombine.high %v536, %v538
  %v711 = vunpack.c.l.s4 1983009808
  %v712 = vunpack.c.0.s8 %v711
  %v713 = vlaneseq
  %v714 = vshrl.u32 %v713, 7
  %v715 = vsub.s32 %v712, %v714
  %v716 = vrot.slane %v708, %v715
  %v718 = vunpack.c.l.s4 1983009808
  %v719 = vunpack.c.0.s8 %v718
  %v720 = vlaneseq
  %v721 = vshrl.u32 %v720, 7
  %v722 = vsub.s32 %v719, %v721
  %v723 = vrot.slane %v709, %v722
  %v724 = vcombine.low %v537, %v539
  %v725 = vcombine.high %v537, %v539
  %v727 = vunpack.c.l.s4 1983009808
  %v728 = vunpack.c.0.s8 %v727
  %v729 = vlaneseq
  %v730 = vshrl.u32 %v729, 7
  %v731 = vsub.s32 %v728, %v730
  %v732 = vrot.slane %v724, %v731
  %v734 = vunpack.c.l.s4 1983009808
  %v735 = vunpack.c.0.s8 %v734
  %v736 = vlaneseq
  %v737 = vshrl.u32 %v736, 7
  %v738 = vsub.s32 %v735, %v737
  %v739 = vrot.slane %v725, %v738
  %v740 = vcombine.low %v684, %v700
  %v741 = vcombine.high %v684, %v700
  %v743 = vunpack.c.l.s4 1934713408
  %v744 = vunpack.c.0.s8 %v743
  %v745 = vlaneseq
  %v746 = vshrl.u32 %v745, 7
  %v747 = vsub.s32 %v744, %v746
  %v748 = vrot.slane %v740, %v747
  %v750 = vunpack.c.l.s4 1934713408
  %v751 = vunpack.c.0.s8 %v750
  %v752 = vlaneseq
  %v753 = vshrl.u32 %v752, 7
  %v754 = vsub.s32 %v751, %v753
  %v755 = vrot.slane %v741, %v754
  %v756 = vcombine.low %v691, %v707
  %v757 = vcombine.high %v691, %v707
  %v759 = vunpack.c.l.s4 1934713408
  %v760 = vunpack.c.0.s8 %v759
  %v761 = vlaneseq
  %v762 = vshrl.u32 %v761, 7
  %v763 = vsub.s32 %v760, %v762
  %v764 = vrot.slane %v756, %v763
  %v766 = vunpack.c.l.s4 1934713408
  %v767 = vunpack.c.0.s8 %v766
  %v768 = vlaneseq
  %v769 = vshrl.u32 %v768, 7
  %v770 = vsub.s32 %v767, %v769
  %v771 = vrot.slane %v757, %v770
  %v772 = vcombine.low %v716, %v732
  %v773 = vcombine.high %v716, %v732
  %v775 = vunpack.c.l.s4 1934713408
  %v776 = vunpack.c.0.s8 %v775
  %v777 = vlaneseq
  %v778 = vshrl.u32 %v777, 7
  %v779 = vsub.s32 %v776, %v778
  %v780 = vrot.slane %v772, %v779
  %v782 = vunpack.c.l.s4 1934713408
  %v783 = vunpack.c.0.s8 %v782
  %v784 = vlaneseq
  %v785 = vshrl.u32 %v784, 7
  %v786 = vsub.s32 %v783, %v785
  %v787 = vrot.slane %v773, %v786
  %v788 = vcombine.low %v723, %v739
  %v789 = vcombine.high %v723, %v739
  %v791 = vunpack.c.l.s4 1934713408
  %v792 = vunpack.c.0.s8 %v791
  %v793 = vlaneseq
  %v794 = vshrl.u32 %v793, 7
  %v795 = vsub.s32 %v792, %v794
  %v796 = vrot.slane %v788, %v795
  %v798 = vunpack.c.l.s4 1934713408
  %v799 = vunpack.c.0.s8 %v798
  %v800 = vlaneseq
  %v801 = vshrl.u32 %v800, 7
  %v802 = vsub.s32 %v799, %v801
  %v803 = vrot.slane %v789, %v802
  %v804 = vcombine.low %v748, %v780
  %v805 = vcombine.high %v748, %v780
  %v806 = vcombine.low %v755, %v787
  %v807 = vcombine.high %v755, %v787
  %v808 = vcombine.low %v764, %v796
  %v809 = vcombine.high %v764, %v796
  %v810 = vcombine.low %v771, %v803
  %v811 = vcombine.high %v771, %v803
  %814 = vrot.lane.b32.xlu0 %v216, 120
  %v815 = vpop.permute.xlu0 %814
  %816 = vrot.lane.b32.xlu0 %v221, 120
  %v817 = vpop.permute.xlu0 %816
  %820 = vrot.lane.b32.xlu0 %v216, 112
  %v821 = vpop.permute.xlu0 %820
  %822 = vrot.lane.b32.xlu0 %v221, 112
  %v823 = vpop.permute.xlu0 %822
  %826 = vrot.lane.b32.xlu0 %v216, 104
  %v827 = vpop.permute.xlu0 %826
  %828 = vrot.lane.b32.xlu0 %v221, 104
  %v829 = vpop.permute.xlu0 %828
  %v832 = vcombine.low %v216, %v821
  %v833 = vcombine.high %v216, %v821
  %v835 = vunpack.c.l.s4 1983009808
  %v836 = vunpack.c.0.s8 %v835
  %v837 = vlaneseq
  %v838 = vshrl.u32 %v837, 7
  %v839 = vsub.s32 %v836, %v838
  %v840 = vrot.slane %v832, %v839
  %v842 = vunpack.c.l.s4 1983009808
  %v843 = vunpack.c.0.s8 %v842
  %v844 = vlaneseq
  %v845 = vshrl.u32 %v844, 7
  %v846 = vsub.s32 %v843, %v845
  %v847 = vrot.slane %v833, %v846
  %v848 = vcombine.low %v815, %v827
  %v849 = vcombine.high %v815, %v827
  %v851 = vunpack.c.l.s4 1983009808
  %v852 = vunpack.c.0.s8 %v851
  %v853 = vlaneseq
  %v854 = vshrl.u32 %v853, 7
  %v855 = vsub.s32 %v852, %v854
  %v856 = vrot.slane %v848, %v855
  %v858 = vunpack.c.l.s4 1983009808
  %v859 = vunpack.c.0.s8 %v858
  %v860 = vlaneseq
  %v861 = vshrl.u32 %v860, 7
  %v862 = vsub.s32 %v859, %v861
  %v863 = vrot.slane %v849, %v862
  %v864 = vcombine.low %v840, %v856
  %v865 = vcombine.high %v840, %v856
  %v867 = vunpack.c.l.s4 1934713408
  %v868 = vunpack.c.0.s8 %v867
  %v869 = vlaneseq
  %v870 = vshrl.u32 %v869, 7
  %v871 = vsub.s32 %v868, %v870
  %v872 = vrot.slane %v864, %v871
  %v874 = vunpack.c.l.s4 1934713408
  %v875 = vunpack.c.0.s8 %v874
  %v876 = vlaneseq
  %v877 = vshrl.u32 %v876, 7
  %v878 = vsub.s32 %v875, %v877
  %v879 = vrot.slane %v865, %v878
  %v880 = vcombine.low %v847, %v863
  %v881 = vcombine.high %v847, %v863
  %v883 = vunpack.c.l.s4 1934713408
  %v884 = vunpack.c.0.s8 %v883
  %v885 = vlaneseq
  %v886 = vshrl.u32 %v885, 7
  %v887 = vsub.s32 %v884, %v886
  %v888 = vrot.slane %v880, %v887
  %v890 = vunpack.c.l.s4 1934713408
  %v891 = vunpack.c.0.s8 %v890
  %v892 = vlaneseq
  %v893 = vshrl.u32 %v892, 7
  %v894 = vsub.s32 %v891, %v893
  %v895 = vrot.slane %v881, %v894
  %v896 = vcombine.high %v872, 0.0
  %v897 = vcombine.high %v879, 0.0
  %v898 = vcombine.high %v888, 0.0
  %v899 = vcombine.high %v895, 0.0
  %v900 = vcombine.low %v221, %v823
  %v901 = vcombine.high %v221, %v823
  %v903 = vunpack.c.l.s4 1983009808
  %v904 = vunpack.c.0.s8 %v903
  %v905 = vlaneseq
  %v906 = vshrl.u32 %v905, 7
  %v907 = vsub.s32 %v904, %v906
  %v908 = vrot.slane %v900, %v907
  %v910 = vunpack.c.l.s4 1983009808
  %v911 = vunpack.c.0.s8 %v910
  %v912 = vlaneseq
  %v913 = vshrl.u32 %v912, 7
  %v914 = vsub.s32 %v911, %v913
  %v915 = vrot.slane %v901, %v914
  %v916 = vcombine.low %v817, %v829
  %v917 = vcombine.high %v817, %v829
  %v919 = vunpack.c.l.s4 1983009808
  %v920 = vunpack.c.0.s8 %v919
  %v921 = vlaneseq
  %v922 = vshrl.u32 %v921, 7
  %v923 = vsub.s32 %v920, %v922
  %v924 = vrot.slane %v916, %v923
  %v926 = vunpack.c.l.s4 1983009808
  %v927 = vunpack.c.0.s8 %v926
  %v928 = vlaneseq
  %v929 = vshrl.u32 %v928, 7
  %v930 = vsub.s32 %v927, %v929
  %v931 = vrot.slane %v917, %v930
  %v932 = vcombine.low %v908, %v924
  %v933 = vcombine.high %v908, %v924
  %v935 = vunpack.c.l.s4 1934713408
  %v936 = vunpack.c.0.s8 %v935
  %v937 = vlaneseq
  %v938 = vshrl.u32 %v937, 7
  %v939 = vsub.s32 %v936, %v938
  %v940 = vrot.slane %v932, %v939
  %v942 = vunpack.c.l.s4 1934713408
  %v943 = vunpack.c.0.s8 %v942
  %v944 = vlaneseq
  %v945 = vshrl.u32 %v944, 7
  %v946 = vsub.s32 %v943, %v945
  %v947 = vrot.slane %v933, %v946
  %v948 = vcombine.low %v915, %v931
  %v949 = vcombine.high %v915, %v931
  %v951 = vunpack.c.l.s4 1934713408
  %v952 = vunpack.c.0.s8 %v951
  %v953 = vlaneseq
  %v954 = vshrl.u32 %v953, 7
  %v955 = vsub.s32 %v952, %v954
  %v956 = vrot.slane %v948, %v955
  %v958 = vunpack.c.l.s4 1934713408
  %v959 = vunpack.c.0.s8 %v958
  %v960 = vlaneseq
  %v961 = vshrl.u32 %v960, 7
  %v962 = vsub.s32 %v959, %v961
  %v963 = vrot.slane %v949, %v962
  %v964 = vcombine.high %v940, 0.0
  %v965 = vcombine.high %v947, 0.0
  %v966 = vcombine.high %v956, 0.0
  %v967 = vcombine.high %v963, 0.0
  %v968 = vcombine.low %v872, %v879
  %v970 = vunpack.c.l.s4 1983009808
  %v971 = vunpack.c.0.s8 %v970
  %v972 = vlaneseq
  %v973 = vshrl.u32 %v972, 7
  %v974 = vsub.s32 %v971, %v973
  %v975 = vrot.slane %v968, %v974
  %v976 = vcombine.low %v896, %v897
  %v978 = vunpack.c.l.s4 1983009808
  %v979 = vunpack.c.0.s8 %v978
  %v980 = vlaneseq
  %v981 = vshrl.u32 %v980, 7
  %v982 = vsub.s32 %v979, %v981
  %v983 = vrot.slane %v976, %v982
  %v984 = vcombine.low %v888, %v895
  %v986 = vunpack.c.l.s4 1983009808
  %v987 = vunpack.c.0.s8 %v986
  %v988 = vlaneseq
  %v989 = vshrl.u32 %v988, 7
  %v990 = vsub.s32 %v987, %v989
  %v991 = vrot.slane %v984, %v990
  %v992 = vcombine.low %v898, %v899
  %v994 = vunpack.c.l.s4 1983009808
  %v995 = vunpack.c.0.s8 %v994
  %v996 = vlaneseq
  %v997 = vshrl.u32 %v996, 7
  %v998 = vsub.s32 %v995, %v997
  %v999 = vrot.slane %v992, %v998
  %v1000 = vcombine.low %v975, %v983
  %v1001 = vcombine.high %v975, %v983
  %v1003 = vunpack.c.l.s4 1934713408
  %v1004 = vunpack.c.0.s8 %v1003
  %v1005 = vlaneseq
  %v1006 = vshrl.u32 %v1005, 7
  %v1007 = vsub.s32 %v1004, %v1006
  %v1008 = vrot.slane %v1000, %v1007
  %v1010 = vunpack.c.l.s4 1934713408
  %v1011 = vunpack.c.0.s8 %v1010
  %v1012 = vlaneseq
  %v1013 = vshrl.u32 %v1012, 7
  %v1014 = vsub.s32 %v1011, %v1013
  %v1015 = vrot.slane %v1001, %v1014
  %v1016 = vcombine.low %v991, %v999
  %v1017 = vcombine.high %v991, %v999
  %v1019 = vunpack.c.l.s4 1934713408
  %v1020 = vunpack.c.0.s8 %v1019
  %v1021 = vlaneseq
  %v1022 = vshrl.u32 %v1021, 7
  %v1023 = vsub.s32 %v1020, %v1022
  %v1024 = vrot.slane %v1016, %v1023
  %v1026 = vunpack.c.l.s4 1934713408
  %v1027 = vunpack.c.0.s8 %v1026
  %v1028 = vlaneseq
  %v1029 = vshrl.u32 %v1028, 7
  %v1030 = vsub.s32 %v1027, %v1029
  %v1031 = vrot.slane %v1017, %v1030
  %v1032 = vcombine.low %v1008, %v1024
  %v1033 = vcombine.high %v1008, %v1024
  %v1034 = vcombine.low %v1015, %v1031
  %v1035 = vcombine.high %v1015, %v1031
  %v1036 = vcombine.low %v940, %v947
  %v1038 = vunpack.c.l.s4 1983009808
  %v1039 = vunpack.c.0.s8 %v1038
  %v1040 = vlaneseq
  %v1041 = vshrl.u32 %v1040, 7
  %v1042 = vsub.s32 %v1039, %v1041
  %v1043 = vrot.slane %v1036, %v1042
  %v1044 = vcombine.low %v964, %v965
  %v1046 = vunpack.c.l.s4 1983009808
  %v1047 = vunpack.c.0.s8 %v1046
  %v1048 = vlaneseq
  %v1049 = vshrl.u32 %v1048, 7
  %v1050 = vsub.s32 %v1047, %v1049
  %v1051 = vrot.slane %v1044, %v1050
  %v1052 = vcombine.low %v956, %v963
  %v1054 = vunpack.c.l.s4 1983009808
  %v1055 = vunpack.c.0.s8 %v1054
  %v1056 = vlaneseq
  %v1057 = vshrl.u32 %v1056, 7
  %v1058 = vsub.s32 %v1055, %v1057
  %v1059 = vrot.slane %v1052, %v1058
  %v1060 = vcombine.low %v966, %v967
  %v1062 = vunpack.c.l.s4 1983009808
  %v1063 = vunpack.c.0.s8 %v1062
  %v1064 = vlaneseq
  %v1065 = vshrl.u32 %v1064, 7
  %v1066 = vsub.s32 %v1063, %v1065
  %v1067 = vrot.slane %v1060, %v1066
  %v1068 = vcombine.low %v1043, %v1051
  %v1069 = vcombine.high %v1043, %v1051
  %v1071 = vunpack.c.l.s4 1934713408
  %v1072 = vunpack.c.0.s8 %v1071
  %v1073 = vlaneseq
  %v1074 = vshrl.u32 %v1073, 7
  %v1075 = vsub.s32 %v1072, %v1074
  %v1076 = vrot.slane %v1068, %v1075
  %v1078 = vunpack.c.l.s4 1934713408
  %v1079 = vunpack.c.0.s8 %v1078
  %v1080 = vlaneseq
  %v1081 = vshrl.u32 %v1080, 7
  %v1082 = vsub.s32 %v1079, %v1081
  %v1083 = vrot.slane %v1069, %v1082
  %v1084 = vcombine.low %v1059, %v1067
  %v1085 = vcombine.high %v1059, %v1067
  %v1087 = vunpack.c.l.s4 1934713408
  %v1088 = vunpack.c.0.s8 %v1087
  %v1089 = vlaneseq
  %v1090 = vshrl.u32 %v1089, 7
  %v1091 = vsub.s32 %v1088, %v1090
  %v1092 = vrot.slane %v1084, %v1091
  %v1094 = vunpack.c.l.s4 1934713408
  %v1095 = vunpack.c.0.s8 %v1094
  %v1096 = vlaneseq
  %v1097 = vshrl.u32 %v1096, 7
  %v1098 = vsub.s32 %v1095, %v1097
  %v1099 = vrot.slane %v1085, %v1098
  %v1100 = vcombine.low %v1076, %v1092
  %v1101 = vcombine.high %v1076, %v1092
  %v1102 = vcombine.low %v1083, %v1099
  %v1103 = vcombine.high %v1083, %v1099
  %vm1104 = vcmask 64512
  %v1106 = vsel %vm1104, %v668, 0
  %v1109 = vsel %vm1104, %v672, 0
  %1111 = vmatprep.subr.mxu0 0.0
  %1112 = vmatpush1.xpose.msra.mxu0 %v1109
  %1113 = vmatprep.subr.mxu0 0.0
  %1114 = vmatpush1.xpose.msra.mxu0 0.0
  %1115 = vmatprep.subr.mxu0 0.0
  %1116 = vmatpush1.xpose.msra.mxu0 0.0
  %1117 = vmatprep.subr.mxu0 0.0
  %1118 = vmatpush1.xpose.msra.mxu0 0.0
  %1119 = vmatprep.subr.mxu0 0.0
  %1120 = vmatpush1.xpose.msra.mxu0 0.0
  %1121 = vmatprep.subr.mxu0 0.0
  %1122 = vmatpush1.xpose.msra.mxu0 0.0
  %1123 = vmatprep.subr.mxu0 0.0
  %1124 = vmatpush1.xpose.msra.mxu0 0.0
  %1125 = vmatprep.subr.mxu0 0.0
  %1126 = vmatpush1.xpose.msra.mxu0 0.0
  %1127 = vmatprep.subr.mxu0 0.0
  %1128 = vmatpush1.xpose.msra.mxu0 0.0
  %1129 = vmatprep.subr.mxu0 0.0
  %1130 = vmatpush1.xpose.msra.mxu0 0.0
  %1131 = vmatprep.subr.mxu0 0.0
  %1132 = vmatpush1.xpose.msra.mxu0 0.0
  %1133 = vmatprep.subr.mxu0 0.0
  %1134 = vmatpush1.xpose.msra.mxu0 0.0
  %1135 = vmatprep.subr.mxu0 0.0
  %1136 = vmatpush1.xpose.msra.mxu0 0.0
  %1137 = vmatprep.subr.mxu0 0.0
  %1138 = vmatpush1.xpose.msra.mxu0 0.0
  %1139 = vmatprep.subr.mxu0 0.0
  %1140 = vmatpush1.xpose.msra.mxu0 0.0
  %1141 = vmatprep.subr.mxu0 0.0
  %1142 = vmatpush1.xpose.msra.mxu0 0.0
  %1143 = vmatprep.subr.mxu0 0.0
  %1144 = vmatpush1.xpose.msra.mxu0 0.0
  %1145 = vmatprep.subr.mxu0 0.0
  %1146 = vmatpush1.xpose.msra.mxu0 0.0
  %1147 = vmatprep.subr.mxu0 0.0
  %1148 = vmatpush1.xpose.msra.mxu0 0.0
  %1149 = vmatprep.subr.mxu0 0.0
  %1150 = vmatpush1.xpose.msra.mxu0 0.0
  %1151 = vmatprep.subr.mxu0 0.0
  %1152 = vmatpush1.xpose.msra.mxu0 0.0
  %1153 = vmatprep.subr.mxu0 0.0
  %1154 = vmatpush1.xpose.msra.mxu0 0.0
  %1155 = vmatprep.subr.mxu0 0.0
  %1156 = vmatpush1.xpose.msra.mxu0 0.0
  %1157 = vmatprep.subr.mxu0 0.0
  %1158 = vmatpush1.xpose.msra.mxu0 0.0
  %1159 = vmatprep.subr.mxu0 0.0
  %1160 = vmatpush1.xpose.msra.mxu0 0.0
  %1161 = vmatprep.subr.mxu0 0.0
  %1162 = vmatpush1.xpose.msra.mxu0 0.0
  %1163 = vmatprep.subr.mxu0 0.0
  %1164 = vmatpush1.xpose.msra.mxu0 0.0
  %1165 = vmatprep.subr.mxu0 0.0
  %1166 = vmatpush1.xpose.msra.mxu0 0.0
  %1167 = vmatprep.subr.mxu0 0.0
  %1168 = vmatpush1.xpose.msra.mxu0 0.0
  %1169 = vmatprep.subr.mxu0 0.0
  %1170 = vmatpush1.xpose.msra.mxu0 0.0
  %1171 = vmatprep.subr.mxu0 0.0
  %1172 = vmatpush1.xpose.msra.mxu0 0.0
  %1173 = vmatprep.subr.mxu0 0.0
  %1174 = vmatpush1.xpose.msra.mxu0 0.0
  %1175 = vmatprep.mubr.f32.mxu0 0.0
  %1176 = vmatmul.mubr.f32.gmra.mrb[0].mxu0 %v1106
  %v1177 = vpop.f32.mrb[0].mxu0
  %v1178 = vadd.f32 0.0, %v1177
  %v1179 = vpop.f32.mrb[0].mxu0
  %1180 = vdwg.mxu0
  %v1182 = vsel %vm1104, %v804, 0
  %v1185 = vsel %vm1104, %v808, 0
  %1187 = vmatprep.subr.mxu0 0.0
  %1188 = vmatpush1.xpose.msra.mxu0 %v1185
  %1189 = vmatprep.subr.mxu0 0.0
  %1190 = vmatpush1.xpose.msra.mxu0 0.0
  %1191 = vmatprep.subr.mxu0 0.0
  %1192 = vmatpush1.xpose.msra.mxu0 0.0
  %1193 = vmatprep.subr.mxu0 0.0
  %1194 = vmatpush1.xpose.msra.mxu0 0.0
  %1195 = vmatprep.subr.mxu0 0.0
  %1196 = vmatpush1.xpose.msra.mxu0 0.0
  %1197 = vmatprep.subr.mxu0 0.0
  %1198 = vmatpush1.xpose.msra.mxu0 0.0
  %1199 = vmatprep.subr.mxu0 0.0
  %1200 = vmatpush1.xpose.msra.mxu0 0.0
  %1201 = vmatprep.subr.mxu0 0.0
  %1202 = vmatpush1.xpose.msra.mxu0 0.0
  %1203 = vmatprep.subr.mxu0 0.0
  %1204 = vmatpush1.xpose.msra.mxu0 0.0
  %1205 = vmatprep.subr.mxu0 0.0
  %1206 = vmatpush1.xpose.msra.mxu0 0.0
  %1207 = vmatprep.subr.mxu0 0.0
  %1208 = vmatpush1.xpose.msra.mxu0 0.0
  %1209 = vmatprep.subr.mxu0 0.0
  %1210 = vmatpush1.xpose.msra.mxu0 0.0
  %1211 = vmatprep.subr.mxu0 0.0
  %1212 = vmatpush1.xpose.msra.mxu0 0.0
  %1213 = vmatprep.subr.mxu0 0.0
  %1214 = vmatpush1.xpose.msra.mxu0 0.0
  %1215 = vmatprep.subr.mxu0 0.0
  %1216 = vmatpush1.xpose.msra.mxu0 0.0
  %1217 = vmatprep.subr.mxu0 0.0
  %1218 = vmatpush1.xpose.msra.mxu0 0.0
  %1219 = vmatprep.subr.mxu0 0.0
  %1220 = vmatpush1.xpose.msra.mxu0 0.0
  %1221 = vmatprep.subr.mxu0 0.0
  %1222 = vmatpush1.xpose.msra.mxu0 0.0
  %1223 = vmatprep.subr.mxu0 0.0
  %1224 = vmatpush1.xpose.msra.mxu0 0.0
  %1225 = vmatprep.subr.mxu0 0.0
  %1226 = vmatpush1.xpose.msra.mxu0 0.0
  %1227 = vmatprep.subr.mxu0 0.0
  %1228 = vmatpush1.xpose.msra.mxu0 0.0
  %1229 = vmatprep.subr.mxu0 0.0
  %1230 = vmatpush1.xpose.msra.mxu0 0.0
  %1231 = vmatprep.subr.mxu0 0.0
  %1232 = vmatpush1.xpose.msra.mxu0 0.0
  %1233 = vmatprep.subr.mxu0 0.0
  %1234 = vmatpush1.xpose.msra.mxu0 0.0
  %1235 = vmatprep.subr.mxu0 0.0
  %1236 = vmatpush1.xpose.msra.mxu0 0.0
  %1237 = vmatprep.subr.mxu0 0.0
  %1238 = vmatpush1.xpose.msra.mxu0 0.0
  %1239 = vmatprep.subr.mxu0 0.0
  %1240 = vmatpush1.xpose.msra.mxu0 0.0
  %1241 = vmatprep.subr.mxu0 0.0
  %1242 = vmatpush1.xpose.msra.mxu0 0.0
  %1243 = vmatprep.subr.mxu0 0.0
  %1244 = vmatpush1.xpose.msra.mxu0 0.0
  %1245 = vmatprep.subr.mxu0 0.0
  %1246 = vmatpush1.xpose.msra.mxu0 0.0
  %1247 = vmatprep.subr.mxu0 0.0
  %1248 = vmatpush1.xpose.msra.mxu0 0.0
  %1249 = vmatprep.subr.mxu0 0.0
  %1250 = vmatpush1.xpose.msra.mxu0 0.0
  %1251 = vmatprep.mubr.f32.mxu0 0.0
  %1252 = vmatmul.mubr.f32.gmra.mrb[0].mxu0 %v1182
  %v1253 = vpop.f32.mrb[0].mxu0
  %v1254 = vadd.f32 0.0, %v1253
  %v1255 = vpop.f32.mrb[0].mxu0
  %1256 = vdwg.mxu0
  %v1258 = vsel %vm1104, %v669, 0
  %v1261 = vsel %vm1104, %v673, 0
  %1263 = vmatprep.subr.mxu0 0.0
  %1264 = vmatpush1.xpose.msra.mxu0 %v1261
  %1265 = vmatprep.subr.mxu0 0.0
  %1266 = vmatpush1.xpose.msra.mxu0 0.0
  %1267 = vmatprep.subr.mxu0 0.0
  %1268 = vmatpush1.xpose.msra.mxu0 0.0
  %1269 = vmatprep.subr.mxu0 0.0
  %1270 = vmatpush1.xpose.msra.mxu0 0.0
  %1271 = vmatprep.subr.mxu0 0.0
  %1272 = vmatpush1.xpose.msra.mxu0 0.0
  %1273 = vmatprep.subr.mxu0 0.0
  %1274 = vmatpush1.xpose.msra.mxu0 0.0
  %1275 = vmatprep.subr.mxu0 0.0
  %1276 = vmatpush1.xpose.msra.mxu0 0.0
  %1277 = vmatprep.subr.mxu0 0.0
  %1278 = vmatpush1.xpose.msra.mxu0 0.0
  %1279 = vmatprep.subr.mxu0 0.0
  %1280 = vmatpush1.xpose.msra.mxu0 0.0
  %1281 = vmatprep.subr.mxu0 0.0
  %1282 = vmatpush1.xpose.msra.mxu0 0.0
  %1283 = vmatprep.subr.mxu0 0.0
  %1284 = vmatpush1.xpose.msra.mxu0 0.0
  %1285 = vmatprep.subr.mxu0 0.0
  %1286 = vmatpush1.xpose.msra.mxu0 0.0
  %1287 = vmatprep.subr.mxu0 0.0
  %1288 = vmatpush1.xpose.msra.mxu0 0.0
  %1289 = vmatprep.subr.mxu0 0.0
  %1290 = vmatpush1.xpose.msra.mxu0 0.0
  %1291 = vmatprep.subr.mxu0 0.0
  %1292 = vmatpush1.xpose.msra.mxu0 0.0
  %1293 = vmatprep.subr.mxu0 0.0
  %1294 = vmatpush1.xpose.msra.mxu0 0.0
  %1295 = vmatprep.subr.mxu0 0.0
  %1296 = vmatpush1.xpose.msra.mxu0 0.0
  %1297 = vmatprep.subr.mxu0 0.0
  %1298 = vmatpush1.xpose.msra.mxu0 0.0
  %1299 = vmatprep.subr.mxu0 0.0
  %1300 = vmatpush1.xpose.msra.mxu0 0.0
  %1301 = vmatprep.subr.mxu0 0.0
  %1302 = vmatpush1.xpose.msra.mxu0 0.0
  %1303 = vmatprep.subr.mxu0 0.0
  %1304 = vmatpush1.xpose.msra.mxu0 0.0
  %1305 = vmatprep.subr.mxu0 0.0
  %1306 = vmatpush1.xpose.msra.mxu0 0.0
  %1307 = vmatprep.subr.mxu0 0.0
  %1308 = vmatpush1.xpose.msra.mxu0 0.0
  %1309 = vmatprep.subr.mxu0 0.0
  %1310 = vmatpush1.xpose.msra.mxu0 0.0
  %1311 = vmatprep.subr.mxu0 0.0
  %1312 = vmatpush1.xpose.msra.mxu0 0.0
  %1313 = vmatprep.subr.mxu0 0.0
  %1314 = vmatpush1.xpose.msra.mxu0 0.0
  %1315 = vmatprep.subr.mxu0 0.0
  %1316 = vmatpush1.xpose.msra.mxu0 0.0
  %1317 = vmatprep.subr.mxu0 0.0
  %1318 = vmatpush1.xpose.msra.mxu0 0.0
  %1319 = vmatprep.subr.mxu0 0.0
  %1320 = vmatpush1.xpose.msra.mxu0 0.0
  %1321 = vmatprep.subr.mxu0 0.0
  %1322 = vmatpush1.xpose.msra.mxu0 0.0
  %1323 = vmatprep.subr.mxu0 0.0
  %1324 = vmatpush1.xpose.msra.mxu0 0.0
  %1325 = vmatprep.subr.mxu0 0.0
  %1326 = vmatpush1.xpose.msra.mxu0 0.0
  %1327 = vmatprep.mubr.f32.mxu0 0.0
  %1328 = vmatmul.mubr.f32.gmra.mrb[0].mxu0 %v1258
  %v1329 = vpop.f32.mrb[0].mxu0
  %v1330 = vadd.f32 0.0, %v1329
  %v1331 = vpop.f32.mrb[0].mxu0
  %1332 = vdwg.mxu0
  %v1334 = vsel %vm1104, %v805, 0
  %v1337 = vsel %vm1104, %v809, 0
  %1339 = vmatprep.subr.mxu0 0.0
  %1340 = vmatpush1.xpose.msra.mxu0 %v1337
  %1341 = vmatprep.subr.mxu0 0.0
  %1342 = vmatpush1.xpose.msra.mxu0 0.0
  %1343 = vmatprep.subr.mxu0 0.0
  %1344 = vmatpush1.xpose.msra.mxu0 0.0
  %1345 = vmatprep.subr.mxu0 0.0
  %1346 = vmatpush1.xpose.msra.mxu0 0.0
  %1347 = vmatprep.subr.mxu0 0.0
  %1348 = vmatpush1.xpose.msra.mxu0 0.0
  %1349 = vmatprep.subr.mxu0 0.0
  %1350 = vmatpush1.xpose.msra.mxu0 0.0
  %1351 = vmatprep.subr.mxu0 0.0
  %1352 = vmatpush1.xpose.msra.mxu0 0.0
  %1353 = vmatprep.subr.mxu0 0.0
  %1354 = vmatpush1.xpose.msra.mxu0 0.0
  %1355 = vmatprep.subr.mxu0 0.0
  %1356 = vmatpush1.xpose.msra.mxu0 0.0
  %1357 = vmatprep.subr.mxu0 0.0
  %1358 = vmatpush1.xpose.msra.mxu0 0.0
  %1359 = vmatprep.subr.mxu0 0.0
  %1360 = vmatpush1.xpose.msra.mxu0 0.0
  %1361 = vmatprep.subr.mxu0 0.0
  %1362 = vmatpush1.xpose.msra.mxu0 0.0
  %1363 = vmatprep.subr.mxu0 0.0
  %1364 = vmatpush1.xpose.msra.mxu0 0.0
  %1365 = vmatprep.subr.mxu0 0.0
  %1366 = vmatpush1.xpose.msra.mxu0 0.0
  %1367 = vmatprep.subr.mxu0 0.0
  %1368 = vmatpush1.xpose.msra.mxu0 0.0
  %1369 = vmatprep.subr.mxu0 0.0
  %1370 = vmatpush1.xpose.msra.mxu0 0.0
  %1371 = vmatprep.subr.mxu0 0.0
  %1372 = vmatpush1.xpose.msra.mxu0 0.0
  %1373 = vmatprep.subr.mxu0 0.0
  %1374 = vmatpush1.xpose.msra.mxu0 0.0
  %1375 = vmatprep.subr.mxu0 0.0
  %1376 = vmatpush1.xpose.msra.mxu0 0.0
  %1377 = vmatprep.subr.mxu0 0.0
  %1378 = vmatpush1.xpose.msra.mxu0 0.0
  %1379 = vmatprep.subr.mxu0 0.0
  %1380 = vmatpush1.xpose.msra.mxu0 0.0
  %1381 = vmatprep.subr.mxu0 0.0
  %1382 = vmatpush1.xpose.msra.mxu0 0.0
  %1383 = vmatprep.subr.mxu0 0.0
  %1384 = vmatpush1.xpose.msra.mxu0 0.0
  %1385 = vmatprep.subr.mxu0 0.0
  %1386 = vmatpush1.xpose.msra.mxu0 0.0
  %1387 = vmatprep.subr.mxu0 0.0
  %1388 = vmatpush1.xpose.msra.mxu0 0.0
  %1389 = vmatprep.subr.mxu0 0.0
  %1390 = vmatpush1.xpose.msra.mxu0 0.0
  %1391 = vmatprep.subr.mxu0 0.0
  %1392 = vmatpush1.xpose.msra.mxu0 0.0
  %1393 = vmatprep.subr.mxu0 0.0
  %1394 = vmatpush1.xpose.msra.mxu0 0.0
  %1395 = vmatprep.subr.mxu0 0.0
  %1396 = vmatpush1.xpose.msra.mxu0 0.0
  %1397 = vmatprep.subr.mxu0 0.0
  %1398 = vmatpush1.xpose.msra.mxu0 0.0
  %1399 = vmatprep.subr.mxu0 0.0
  %1400 = vmatpush1.xpose.msra.mxu0 0.0
  %1401 = vmatprep.subr.mxu0 0.0
  %1402 = vmatpush1.xpose.msra.mxu0 0.0
  %1403 = vmatprep.mubr.f32.mxu0 0.0
  %1404 = vmatmul.mubr.f32.gmra.mrb[0].mxu0 %v1334
  %v1405 = vpop.f32.mrb[0].mxu0
  %v1406 = vadd.f32 0.0, %v1405
  %v1407 = vpop.f32.mrb[0].mxu0
  %1408 = vdwg.mxu0
  %v1410 = vsel %vm1104, %v670, 0
  %v1413 = vsel %vm1104, %v674, 0
  %1415 = vmatprep.subr.mxu0 0.0
  %1416 = vmatpush1.xpose.msra.mxu0 %v1413
  %1417 = vmatprep.subr.mxu0 0.0
  %1418 = vmatpush1.xpose.msra.mxu0 0.0
  %1419 = vmatprep.subr.mxu0 0.0
  %1420 = vmatpush1.xpose.msra.mxu0 0.0
  %1421 = vmatprep.subr.mxu0 0.0
  %1422 = vmatpush1.xpose.msra.mxu0 0.0
  %1423 = vmatprep.subr.mxu0 0.0
  %1424 = vmatpush1.xpose.msra.mxu0 0.0
  %1425 = vmatprep.subr.mxu0 0.0
  %1426 = vmatpush1.xpose.msra.mxu0 0.0
  %1427 = vmatprep.subr.mxu0 0.0
  %1428 = vmatpush1.xpose.msra.mxu0 0.0
  %1429 = vmatprep.subr.mxu0 0.0
  %1430 = vmatpush1.xpose.msra.mxu0 0.0
  %1431 = vmatprep.subr.mxu0 0.0
  %1432 = vmatpush1.xpose.msra.mxu0 0.0
  %1433 = vmatprep.subr.mxu0 0.0
  %1434 = vmatpush1.xpose.msra.mxu0 0.0
  %1435 = vmatprep.subr.mxu0 0.0
  %1436 = vmatpush1.xpose.msra.mxu0 0.0
  %1437 = vmatprep.subr.mxu0 0.0
  %1438 = vmatpush1.xpose.msra.mxu0 0.0
  %1439 = vmatprep.subr.mxu0 0.0
  %1440 = vmatpush1.xpose.msra.mxu0 0.0
  %1441 = vmatprep.subr.mxu0 0.0
  %1442 = vmatpush1.xpose.msra.mxu0 0.0
  %1443 = vmatprep.subr.mxu0 0.0
  %1444 = vmatpush1.xpose.msra.mxu0 0.0
  %1445 = vmatprep.subr.mxu0 0.0
  %1446 = vmatpush1.xpose.msra.mxu0 0.0
  %1447 = vmatprep.subr.mxu0 0.0
  %1448 = vmatpush1.xpose.msra.mxu0 0.0
  %1449 = vmatprep.subr.mxu0 0.0
  %1450 = vmatpush1.xpose.msra.mxu0 0.0
  %1451 = vmatprep.subr.mxu0 0.0
  %1452 = vmatpush1.xpose.msra.mxu0 0.0
  %1453 = vmatprep.subr.mxu0 0.0
  %1454 = vmatpush1.xpose.msra.mxu0 0.0
  %1455 = vmatprep.subr.mxu0 0.0
  %1456 = vmatpush1.xpose.msra.mxu0 0.0
  %1457 = vmatprep.subr.mxu0 0.0
  %1458 = vmatpush1.xpose.msra.mxu0 0.0
  %1459 = vmatprep.subr.mxu0 0.0
  %1460 = vmatpush1.xpose.msra.mxu0 0.0
  %1461 = vmatprep.subr.mxu0 0.0
  %1462 = vmatpush1.xpose.msra.mxu0 0.0
  %1463 = vmatprep.subr.mxu0 0.0
  %1464 = vmatpush1.xpose.msra.mxu0 0.0
  %1465 = vmatprep.subr.mxu0 0.0
  %1466 = vmatpush1.xpose.msra.mxu0 0.0
  %1467 = vmatprep.subr.mxu0 0.0
  %1468 = vmatpush1.xpose.msra.mxu0 0.0
  %1469 = vmatprep.subr.mxu0 0.0
  %1470 = vmatpush1.xpose.msra.mxu0 0.0
  %1471 = vmatprep.subr.mxu0 0.0
  %1472 = vmatpush1.xpose.msra.mxu0 0.0
  %1473 = vmatprep.subr.mxu0 0.0
  %1474 = vmatpush1.xpose.msra.mxu0 0.0
  %1475 = vmatprep.subr.mxu0 0.0
  %1476 = vmatpush1.xpose.msra.mxu0 0.0
  %1477 = vmatprep.subr.mxu0 0.0
  %1478 = vmatpush1.xpose.msra.mxu0 0.0
  %1479 = vmatprep.mubr.f32.mxu0 0.0
  %1480 = vmatmul.mubr.f32.gmra.mrb[0].mxu0 %v1410
  %v1481 = vpop.f32.mrb[0].mxu0
  %v1482 = vadd.f32 0.0, %v1481
  %v1483 = vpop.f32.mrb[0].mxu0
  %1484 = vdwg.mxu0
  %v1486 = vsel %vm1104, %v806, 0
  %v1489 = vsel %vm1104, %v810, 0
  %1491 = vmatprep.subr.mxu0 0.0
  %1492 = vmatpush1.xpose.msra.mxu0 %v1489
  %1493 = vmatprep.subr.mxu0 0.0
  %1494 = vmatpush1.xpose.msra.mxu0 0.0
  %1495 = vmatprep.subr.mxu0 0.0
  %1496 = vmatpush1.xpose.msra.mxu0 0.0
  %1497 = vmatprep.subr.mxu0 0.0
  %1498 = vmatpush1.xpose.msra.mxu0 0.0
  %1499 = vmatprep.subr.mxu0 0.0
  %1500 = vmatpush1.xpose.msra.mxu0 0.0
  %1501 = vmatprep.subr.mxu0 0.0
  %1502 = vmatpush1.xpose.msra.mxu0 0.0
  %1503 = vmatprep.subr.mxu0 0.0
  %1504 = vmatpush1.xpose.msra.mxu0 0.0
  %1505 = vmatprep.subr.mxu0 0.0
  %1506 = vmatpush1.xpose.msra.mxu0 0.0
  %1507 = vmatprep.subr.mxu0 0.0
  %1508 = vmatpush1.xpose.msra.mxu0 0.0
  %1509 = vmatprep.subr.mxu0 0.0
  %1510 = vmatpush1.xpose.msra.mxu0 0.0
  %1511 = vmatprep.subr.mxu0 0.0
  %1512 = vmatpush1.xpose.msra.mxu0 0.0
  %1513 = vmatprep.subr.mxu0 0.0
  %1514 = vmatpush1.xpose.msra.mxu0 0.0
  %1515 = vmatprep.subr.mxu0 0.0
  %1516 = vmatpush1.xpose.msra.mxu0 0.0
  %1517 = vmatprep.subr.mxu0 0.0
  %1518 = vmatpush1.xpose.msra.mxu0 0.0
  %1519 = vmatprep.subr.mxu0 0.0
  %1520 = vmatpush1.xpose.msra.mxu0 0.0
  %1521 = vmatprep.subr.mxu0 0.0
  %1522 = vmatpush1.xpose.msra.mxu0 0.0
  %1523 = vmatprep.subr.mxu0 0.0
  %1524 = vmatpush1.xpose.msra.mxu0 0.0
  %1525 = vmatprep.subr.mxu0 0.0
  %1526 = vmatpush1.xpose.msra.mxu0 0.0
  %1527 = vmatprep.subr.mxu0 0.0
  %1528 = vmatpush1.xpose.msra.mxu0 0.0
  %1529 = vmatprep.subr.mxu0 0.0
  %1530 = vmatpush1.xpose.msra.mxu0 0.0
  %1531 = vmatprep.subr.mxu0 0.0
  %1532 = vmatpush1.xpose.msra.mxu0 0.0
  %1533 = vmatprep.subr.mxu0 0.0
  %1534 = vmatpush1.xpose.msra.mxu0 0.0
  %1535 = vmatprep.subr.mxu0 0.0
  %1536 = vmatpush1.xpose.msra.mxu0 0.0
  %1537 = vmatprep.subr.mxu0 0.0
  %1538 = vmatpush1.xpose.msra.mxu0 0.0
  %1539 = vmatprep.subr.mxu0 0.0
  %1540 = vmatpush1.xpose.msra.mxu0 0.0
  %1541 = vmatprep.subr.mxu0 0.0
  %1542 = vmatpush1.xpose.msra.mxu0 0.0
  %1543 = vmatprep.subr.mxu0 0.0
  %1544 = vmatpush1.xpose.msra.mxu0 0.0
  %1545 = vmatprep.subr.mxu0 0.0
  %1546 = vmatpush1.xpose.msra.mxu0 0.0
  %1547 = vmatprep.subr.mxu0 0.0
  %1548 = vmatpush1.xpose.msra.mxu0 0.0
  %1549 = vmatprep.subr.mxu0 0.0
  %1550 = vmatpush1.xpose.msra.mxu0 0.0
  %1551 = vmatprep.subr.mxu0 0.0
  %1552 = vmatpush1.xpose.msra.mxu0 0.0
  %1553 = vmatprep.subr.mxu0 0.0
  %1554 = vmatpush1.xpose.msra.mxu0 0.0
  %1555 = vmatprep.mubr.f32.mxu0 0.0
  %1556 = vmatmul.mubr.f32.gmra.mrb[0].mxu0 %v1486
  %v1557 = vpop.f32.mrb[0].mxu0
  %v1558 = vadd.f32 0.0, %v1557
  %v1559 = vpop.f32.mrb[0].mxu0
  %1560 = vdwg.mxu0
  %v1562 = vsel %vm1104, %v671, 0
  %v1565 = vsel %vm1104, %v675, 0
  %1567 = vmatprep.subr.mxu0 0.0
  %1568 = vmatpush1.xpose.msra.mxu0 %v1565
  %1569 = vmatprep.subr.mxu0 0.0
  %1570 = vmatpush1.xpose.msra.mxu0 0.0
  %1571 = vmatprep.subr.mxu0 0.0
  %1572 = vmatpush1.xpose.msra.mxu0 0.0
  %1573 = vmatprep.subr.mxu0 0.0
  %1574 = vmatpush1.xpose.msra.mxu0 0.0
  %1575 = vmatprep.subr.mxu0 0.0
  %1576 = vmatpush1.xpose.msra.mxu0 0.0
  %1577 = vmatprep.subr.mxu0 0.0
  %1578 = vmatpush1.xpose.msra.mxu0 0.0
  %1579 = vmatprep.subr.mxu0 0.0
  %1580 = vmatpush1.xpose.msra.mxu0 0.0
  %1581 = vmatprep.subr.mxu0 0.0
  %1582 = vmatpush1.xpose.msra.mxu0 0.0
  %1583 = vmatprep.subr.mxu0 0.0
  %1584 = vmatpush1.xpose.msra.mxu0 0.0
  %1585 = vmatprep.subr.mxu0 0.0
  %1586 = vmatpush1.xpose.msra.mxu0 0.0
  %1587 = vmatprep.subr.mxu0 0.0
  %1588 = vmatpush1.xpose.msra.mxu0 0.0
  %1589 = vmatprep.subr.mxu0 0.0
  %1590 = vmatpush1.xpose.msra.mxu0 0.0
  %1591 = vmatprep.subr.mxu0 0.0
  %1592 = vmatpush1.xpose.msra.mxu0 0.0
  %1593 = vmatprep.subr.mxu0 0.0
  %1594 = vmatpush1.xpose.msra.mxu0 0.0
  %1595 = vmatprep.subr.mxu0 0.0
  %1596 = vmatpush1.xpose.msra.mxu0 0.0
  %1597 = vmatprep.subr.mxu0 0.0
  %1598 = vmatpush1.xpose.msra.mxu0 0.0
  %1599 = vmatprep.subr.mxu0 0.0
  %1600 = vmatpush1.xpose.msra.mxu0 0.0
  %1601 = vmatprep.subr.mxu0 0.0
  %1602 = vmatpush1.xpose.msra.mxu0 0.0
  %1603 = vmatprep.subr.mxu0 0.0
  %1604 = vmatpush1.xpose.msra.mxu0 0.0
  %1605 = vmatprep.subr.mxu0 0.0
  %1606 = vmatpush1.xpose.msra.mxu0 0.0
  %1607 = vmatprep.subr.mxu0 0.0
  %1608 = vmatpush1.xpose.msra.mxu0 0.0
  %1609 = vmatprep.subr.mxu0 0.0
  %1610 = vmatpush1.xpose.msra.mxu0 0.0
  %1611 = vmatprep.subr.mxu0 0.0
  %1612 = vmatpush1.xpose.msra.mxu0 0.0
  %1613 = vmatprep.subr.mxu0 0.0
  %1614 = vmatpush1.xpose.msra.mxu0 0.0
  %1615 = vmatprep.subr.mxu0 0.0
  %1616 = vmatpush1.xpose.msra.mxu0 0.0
  %1617 = vmatprep.subr.mxu0 0.0
  %1618 = vmatpush1.xpose.msra.mxu0 0.0
  %1619 = vmatprep.subr.mxu0 0.0
  %1620 = vmatpush1.xpose.msra.mxu0 0.0
  %1621 = vmatprep.subr.mxu0 0.0
  %1622 = vmatpush1.xpose.msra.mxu0 0.0
  %1623 = vmatprep.subr.mxu0 0.0
  %1624 = vmatpush1.xpose.msra.mxu0 0.0
  %1625 = vmatprep.subr.mxu0 0.0
  %1626 = vmatpush1.xpose.msra.mxu0 0.0
  %1627 = vmatprep.subr.mxu0 0.0
  %1628 = vmatpush1.xpose.msra.mxu0 0.0
  %1629 = vmatprep.subr.mxu0 0.0
  %1630 = vmatpush1.xpose.msra.mxu0 0.0
  %1631 = vmatprep.mubr.f32.mxu0 0.0
  %1632 = vmatmul.mubr.f32.gmra.mrb[0].mxu0 %v1562
  %v1633 = vpop.f32.mrb[0].mxu0
  %v1634 = vadd.f32 0.0, %v1633
  %v1635 = vpop.f32.mrb[0].mxu0
  %1636 = vdwg.mxu0
  %v1638 = vsel %vm1104, %v807, 0
  %v1641 = vsel %vm1104, %v811, 0
  %1643 = vmatprep.subr.mxu0 0.0
  %1644 = vmatpush1.xpose.msra.mxu0 %v1641
  %1645 = vmatprep.subr.mxu0 0.0
  %1646 = vmatpush1.xpose.msra.mxu0 0.0
  %1647 = vmatprep.subr.mxu0 0.0
  %1648 = vmatpush1.xpose.msra.mxu0 0.0
  %1649 = vmatprep.subr.mxu0 0.0
  %1650 = vmatpush1.xpose.msra.mxu0 0.0
  %1651 = vmatprep.subr.mxu0 0.0
  %1652 = vmatpush1.xpose.msra.mxu0 0.0
  %1653 = vmatprep.subr.mxu0 0.0
  %1654 = vmatpush1.xpose.msra.mxu0 0.0
  %1655 = vmatprep.subr.mxu0 0.0
  %1656 = vmatpush1.xpose.msra.mxu0 0.0
  %1657 = vmatprep.subr.mxu0 0.0
  %1658 = vmatpush1.xpose.msra.mxu0 0.0
  %1659 = vmatprep.subr.mxu0 0.0
  %1660 = vmatpush1.xpose.msra.mxu0 0.0
  %1661 = vmatprep.subr.mxu0 0.0
  %1662 = vmatpush1.xpose.msra.mxu0 0.0
  %1663 = vmatprep.subr.mxu0 0.0
  %1664 = vmatpush1.xpose.msra.mxu0 0.0
  %1665 = vmatprep.subr.mxu0 0.0
  %1666 = vmatpush1.xpose.msra.mxu0 0.0
  %1667 = vmatprep.subr.mxu0 0.0
  %1668 = vmatpush1.xpose.msra.mxu0 0.0
  %1669 = vmatprep.subr.mxu0 0.0
  %1670 = vmatpush1.xpose.msra.mxu0 0.0
  %1671 = vmatprep.subr.mxu0 0.0
  %1672 = vmatpush1.xpose.msra.mxu0 0.0
  %1673 = vmatprep.subr.mxu0 0.0
  %1674 = vmatpush1.xpose.msra.mxu0 0.0
  %1675 = vmatprep.subr.mxu0 0.0
  %1676 = vmatpush1.xpose.msra.mxu0 0.0
  %1677 = vmatprep.subr.mxu0 0.0
  %1678 = vmatpush1.xpose.msra.mxu0 0.0
  %1679 = vmatprep.subr.mxu0 0.0
  %1680 = vmatpush1.xpose.msra.mxu0 0.0
  %1681 = vmatprep.subr.mxu0 0.0
  %1682 = vmatpush1.xpose.msra.mxu0 0.0
  %1683 = vmatprep.subr.mxu0 0.0
  %1684 = vmatpush1.xpose.msra.mxu0 0.0
  %1685 = vmatprep.subr.mxu0 0.0
  %1686 = vmatpush1.xpose.msra.mxu0 0.0
  %1687 = vmatprep.subr.mxu0 0.0
  %1688 = vmatpush1.xpose.msra.mxu0 0.0
  %1689 = vmatprep.subr.mxu0 0.0
  %1690 = vmatpush1.xpose.msra.mxu0 0.0
  %1691 = vmatprep.subr.mxu0 0.0
  %1692 = vmatpush1.xpose.msra.mxu0 0.0
  %1693 = vmatprep.subr.mxu0 0.0
  %1694 = vmatpush1.xpose.msra.mxu0 0.0
  %1695 = vmatprep.subr.mxu0 0.0
  %1696 = vmatpush1.xpose.msra.mxu0 0.0
  %1697 = vmatprep.subr.mxu0 0.0
  %1698 = vmatpush1.xpose.msra.mxu0 0.0
  %1699 = vmatprep.subr.mxu0 0.0
  %1700 = vmatpush1.xpose.msra.mxu0 0.0
  %1701 = vmatprep.subr.mxu0 0.0
  %1702 = vmatpush1.xpose.msra.mxu0 0.0
  %1703 = vmatprep.subr.mxu0 0.0
  %1704 = vmatpush1.xpose.msra.mxu0 0.0
  %1705 = vmatprep.subr.mxu0 0.0
  %1706 = vmatpush1.xpose.msra.mxu0 0.0
  %1707 = vmatprep.mubr.f32.mxu0 0.0
  %1708 = vmatmul.mubr.f32.gmra.mrb[0].mxu0 %v1638
  %v1709 = vpop.f32.mrb[0].mxu0
  %v1710 = vadd.f32 0.0, %v1709
  %v1711 = vpop.f32.mrb[0].mxu0
  %1712 = vdwg.mxu0
  %v1713 = vsel %vm1104, %v1178, -inf
  %1714 = vmax.xlane.f32.xlu0 %v1713
  %v1715 = vpop.xlane.xlu0 %1714
  %v1716 = vsel %vm1104, %v1254, -inf
  %1717 = vmax.xlane.f32.xlu0 %v1716
  %v1718 = vpop.xlane.xlu0 %1717
  %v1719 = vsel %vm1104, %v1330, -inf
  %1720 = vmax.xlane.f32.xlu0 %v1719
  %v1721 = vpop.xlane.xlu0 %1720
  %v1722 = vsel %vm1104, %v1406, -inf
  %1723 = vmax.xlane.f32.xlu0 %v1722
  %v1724 = vpop.xlane.xlu0 %1723
  %v1725 = vsel %vm1104, %v1482, -inf
  %1726 = vmax.xlane.f32.xlu0 %v1725
  %v1727 = vpop.xlane.xlu0 %1726
  %v1728 = vsel %vm1104, %v1558, -inf
  %1729 = vmax.xlane.f32.xlu0 %v1728
  %v1730 = vpop.xlane.xlu0 %1729
  %v1731 = vsel %vm1104, %v1634, -inf
  %1732 = vmax.xlane.f32.xlu0 %v1731
  %v1733 = vpop.xlane.xlu0 %1732
  %v1734 = vsel %vm1104, %v1710, -inf
  %1735 = vmax.xlane.f32.xlu0 %v1734
  %v1736 = vpop.xlane.xlu0 %1735
  %v1737 = vsub.f32 %v1178, %v1715
  %v1738 = vsub.f32 %v1254, %v1718
  %v1739 = vsub.f32 %v1330, %v1721
  %v1740 = vsub.f32 %v1406, %v1724
  %v1741 = vsub.f32 %v1482, %v1727
  %v1742 = vsub.f32 %v1558, %v1730
  %v1743 = vsub.f32 %v1634, %v1733
  %v1744 = vsub.f32 %v1710, %v1736
  %v1745 = vmul.f32 %v1737, 1.442695
  %v1746 = vpow.pop %v1745
  %v1747 = vmul.f32 %v1738, 1.442695
  %v1748 = vpow.pop %v1747
  %v1749 = vmul.f32 %v1739, 1.442695
  %v1750 = vpow.pop %v1749
  %v1751 = vmul.f32 %v1740, 1.442695
  %v1752 = vpow.pop %v1751
  %v1753 = vmul.f32 %v1741, 1.442695
  %v1754 = vpow.pop %v1753
  %v1755 = vmul.f32 %v1742, 1.442695
  %v1756 = vpow.pop %v1755
  %v1757 = vmul.f32 %v1743, 1.442695
  %v1758 = vpow.pop %v1757
  %v1759 = vmul.f32 %v1744, 1.442695
  %v1760 = vpow.pop %v1759
  %v1761 = vsel %vm1104, %v1746, 0.0
  %1762 = vadd.xlane.f32.xlu0 %v1761
  %v1763 = vpop.xlane.xlu0 %1762
  %v1764 = vsel %vm1104, %v1748, 0.0
  %1765 = vadd.xlane.f32.xlu0 %v1764
  %v1766 = vpop.xlane.xlu0 %1765
  %v1767 = vsel %vm1104, %v1750, 0.0
  %1768 = vadd.xlane.f32.xlu0 %v1767
  %v1769 = vpop.xlane.xlu0 %1768
  %v1770 = vsel %vm1104, %v1752, 0.0
  %1771 = vadd.xlane.f32.xlu0 %v1770
  %v1772 = vpop.xlane.xlu0 %1771
  %v1773 = vsel %vm1104, %v1754, 0.0
  %1774 = vadd.xlane.f32.xlu0 %v1773
  %v1775 = vpop.xlane.xlu0 %1774
  %v1776 = vsel %vm1104, %v1756, 0.0
  %1777 = vadd.xlane.f32.xlu0 %v1776
  %v1778 = vpop.xlane.xlu0 %1777
  %v1779 = vsel %vm1104, %v1758, 0.0
  %1780 = vadd.xlane.f32.xlu0 %v1779
  %v1781 = vpop.xlane.xlu0 %1780
  %v1782 = vsel %vm1104, %v1760, 0.0
  %1783 = vadd.xlane.f32.xlu0 %v1782
  %v1784 = vpop.xlane.xlu0 %1783
  %v1785 = vrcp.pop %v1763
  %v1786 = vrcp.pop %v1766
  %v1787 = vrcp.pop %v1769
  %v1788 = vrcp.pop %v1772
  %v1789 = vrcp.pop %v1775
  %v1790 = vrcp.pop %v1778
  %v1791 = vrcp.pop %v1781
  %v1792 = vrcp.pop %v1784
  %v1793 = vmul.f32 %v1746, %v1785
  %v1794 = vmul.f32 %v1748, %v1786
  %v1795 = vmul.f32 %v1750, %v1787
  %v1796 = vmul.f32 %v1752, %v1788
  %v1797 = vmul.f32 %v1754, %v1789
  %v1798 = vmul.f32 %v1756, %v1790
  %v1799 = vmul.f32 %v1758, %v1791
  %v1800 = vmul.f32 %v1760, %v1792
  %v1802 = vsel %vm1104, %v1793, 0
  %1804 = vmatprep.subr.mxu0 0.0
  %1805 = vmatpush1.msra.mxu0 %v1032
  %1806 = vmatprep.subr.mxu0 0.0
  %1807 = vmatpush1.msra.mxu0 0.0
  %1808 = vmatprep.subr.mxu0 0.0
  %1809 = vmatpush1.msra.mxu0 0.0
  %1810 = vmatprep.subr.mxu0 0.0
  %1811 = vmatpush1.msra.mxu0 0.0
  %1812 = vmatprep.subr.mxu0 0.0
  %1813 = vmatpush1.msra.mxu0 0.0
  %1814 = vmatprep.subr.mxu0 0.0
  %1815 = vmatpush1.msra.mxu0 0.0
  %1816 = vmatprep.subr.mxu0 0.0
  %1817 = vmatpush1.msra.mxu0 0.0
  %1818 = vmatprep.subr.mxu0 0.0
  %1819 = vmatpush1.msra.mxu0 0.0
  %1820 = vmatprep.subr.mxu0 0.0
  %1821 = vmatpush1.msra.mxu0 0.0
  %1822 = vmatprep.subr.mxu0 0.0
  %1823 = vmatpush1.msra.mxu0 0.0
  %1824 = vmatprep.subr.mxu0 0.0
  %1825 = vmatpush1.msra.mxu0 0.0
  %1826 = vmatprep.subr.mxu0 0.0
  %1827 = vmatpush1.msra.mxu0 0.0
  %1828 = vmatprep.subr.mxu0 0.0
  %1829 = vmatpush1.msra.mxu0 0.0
  %1830 = vmatprep.subr.mxu0 0.0
  %1831 = vmatpush1.msra.mxu0 0.0
  %1832 = vmatprep.subr.mxu0 0.0
  %1833 = vmatpush1.msra.mxu0 0.0
  %1834 = vmatprep.subr.mxu0 0.0
  %1835 = vmatpush1.msra.mxu0 0.0
  %1836 = vmatprep.subr.mxu0 0.0
  %1837 = vmatpush1.msra.mxu0 0.0
  %1838 = vmatprep.subr.mxu0 0.0
  %1839 = vmatpush1.msra.mxu0 0.0
  %1840 = vmatprep.subr.mxu0 0.0
  %1841 = vmatpush1.msra.mxu0 0.0
  %1842 = vmatprep.subr.mxu0 0.0
  %1843 = vmatpush1.msra.mxu0 0.0
  %1844 = vmatprep.subr.mxu0 0.0
  %1845 = vmatpush1.msra.mxu0 0.0
  %1846 = vmatprep.subr.mxu0 0.0
  %1847 = vmatpush1.msra.mxu0 0.0
  %1848 = vmatprep.subr.mxu0 0.0
  %1849 = vmatpush1.msra.mxu0 0.0
  %1850 = vmatprep.subr.mxu0 0.0
  %1851 = vmatpush1.msra.mxu0 0.0
  %1852 = vmatprep.subr.mxu0 0.0
  %1853 = vmatpush1.msra.mxu0 0.0
  %1854 = vmatprep.subr.mxu0 0.0
  %1855 = vmatpush1.msra.mxu0 0.0
  %1856 = vmatprep.subr.mxu0 0.0
  %1857 = vmatpush1.msra.mxu0 0.0
  %1858 = vmatprep.subr.mxu0 0.0
  %1859 = vmatpush1.msra.mxu0 0.0
  %1860 = vmatprep.subr.mxu0 0.0
  %1861 = vmatpush1.msra.mxu0 0.0
  %1862 = vmatprep.subr.mxu0 0.0
  %1863 = vmatpush1.msra.mxu0 0.0
  %1864 = vmatprep.subr.mxu0 0.0
  %1865 = vmatpush1.msra.mxu0 0.0
  %1866 = vmatprep.subr.mxu0 0.0
  %1867 = vmatpush1.msra.mxu0 0.0
  %1868 = vmatprep.mubr.f32.mxu0 0.0
  %1869 = vmatmul.mubr.f32.gmra.mrb[0].mxu0 %v1802
  %v1870 = vpop.f32.mrb[0].mxu0
  %v1871 = vadd.f32 0.0, %v1870
  %v1872 = vpop.f32.mrb[0].mxu0
  %1873 = vdwg.mxu0
  %v1875 = vsel %vm1104, %v1794, 0
  %1877 = vmatprep.subr.mxu0 0.0
  %1878 = vmatpush1.msra.mxu0 %v1100
  %1879 = vmatprep.subr.mxu0 0.0
  %1880 = vmatpush1.msra.mxu0 0.0
  %1881 = vmatprep.subr.mxu0 0.0
  %1882 = vmatpush1.msra.mxu0 0.0
  %1883 = vmatprep.subr.mxu0 0.0
  %1884 = vmatpush1.msra.mxu0 0.0
  %1885 = vmatprep.subr.mxu0 0.0
  %1886 = vmatpush1.msra.mxu0 0.0
  %1887 = vmatprep.subr.mxu0 0.0
  %1888 = vmatpush1.msra.mxu0 0.0
  %1889 = vmatprep.subr.mxu0 0.0
  %1890 = vmatpush1.msra.mxu0 0.0
  %1891 = vmatprep.subr.mxu0 0.0
  %1892 = vmatpush1.msra.mxu0 0.0
  %1893 = vmatprep.subr.mxu0 0.0
  %1894 = vmatpush1.msra.mxu0 0.0
  %1895 = vmatprep.subr.mxu0 0.0
  %1896 = vmatpush1.msra.mxu0 0.0
  %1897 = vmatprep.subr.mxu0 0.0
  %1898 = vmatpush1.msra.mxu0 0.0
  %1899 = vmatprep.subr.mxu0 0.0
  %1900 = vmatpush1.msra.mxu0 0.0
  %1901 = vmatprep.subr.mxu0 0.0
  %1902 = vmatpush1.msra.mxu0 0.0
  %1903 = vmatprep.subr.mxu0 0.0
  %1904 = vmatpush1.msra.mxu0 0.0
  %1905 = vmatprep.subr.mxu0 0.0
  %1906 = vmatpush1.msra.mxu0 0.0
  %1907 = vmatprep.subr.mxu0 0.0
  %1908 = vmatpush1.msra.mxu0 0.0
  %1909 = vmatprep.subr.mxu0 0.0
  %1910 = vmatpush1.msra.mxu0 0.0
  %1911 = vmatprep.subr.mxu0 0.0
  %1912 = vmatpush1.msra.mxu0 0.0
  %1913 = vmatprep.subr.mxu0 0.0
  %1914 = vmatpush1.msra.mxu0 0.0
  %1915 = vmatprep.subr.mxu0 0.0
  %1916 = vmatpush1.msra.mxu0 0.0
  %1917 = vmatprep.subr.mxu0 0.0
  %1918 = vmatpush1.msra.mxu0 0.0
  %1919 = vmatprep.subr.mxu0 0.0
  %1920 = vmatpush1.msra.mxu0 0.0
  %1921 = vmatprep.subr.mxu0 0.0
  %1922 = vmatpush1.msra.mxu0 0.0
  %1923 = vmatprep.subr.mxu0 0.0
  %1924 = vmatpush1.msra.mxu0 0.0
  %1925 = vmatprep.subr.mxu0 0.0
  %1926 = vmatpush1.msra.mxu0 0.0
  %1927 = vmatprep.subr.mxu0 0.0
  %1928 = vmatpush1.msra.mxu0 0.0
  %1929 = vmatprep.subr.mxu0 0.0
  %1930 = vmatpush1.msra.mxu0 0.0
  %1931 = vmatprep.subr.mxu0 0.0
  %1932 = vmatpush1.msra.mxu0 0.0
  %1933 = vmatprep.subr.mxu0 0.0
  %1934 = vmatpush1.msra.mxu0 0.0
  %1935 = vmatprep.subr.mxu0 0.0
  %1936 = vmatpush1.msra.mxu0 0.0
  %1937 = vmatprep.subr.mxu0 0.0
  %1938 = vmatpush1.msra.mxu0 0.0
  %1939 = vmatprep.subr.mxu0 0.0
  %1940 = vmatpush1.msra.mxu0 0.0
  %1941 = vmatprep.mubr.f32.mxu0 0.0
  %1942 = vmatmul.mubr.f32.gmra.mrb[0].mxu0 %v1875
  %v1943 = vpop.f32.mrb[0].mxu0
  %v1944 = vadd.f32 0.0, %v1943
  %v1945 = vpop.f32.mrb[0].mxu0
  %1946 = vdwg.mxu0
  %v1948 = vsel %vm1104, %v1795, 0
  %1950 = vmatprep.subr.mxu0 0.0
  %1951 = vmatpush1.msra.mxu0 %v1033
  %1952 = vmatprep.subr.mxu0 0.0
  %1953 = vmatpush1.msra.mxu0 0.0
  %1954 = vmatprep.subr.mxu0 0.0
  %1955 = vmatpush1.msra.mxu0 0.0
  %1956 = vmatprep.subr.mxu0 0.0
  %1957 = vmatpush1.msra.mxu0 0.0
  %1958 = vmatprep.subr.mxu0 0.0
  %1959 = vmatpush1.msra.mxu0 0.0
  %1960 = vmatprep.subr.mxu0 0.0
  %1961 = vmatpush1.msra.mxu0 0.0
  %1962 = vmatprep.subr.mxu0 0.0
  %1963 = vmatpush1.msra.mxu0 0.0
  %1964 = vmatprep.subr.mxu0 0.0
  %1965 = vmatpush1.msra.mxu0 0.0
  %1966 = vmatprep.subr.mxu0 0.0
  %1967 = vmatpush1.msra.mxu0 0.0
  %1968 = vmatprep.subr.mxu0 0.0
  %1969 = vmatpush1.msra.mxu0 0.0
  %1970 = vmatprep.subr.mxu0 0.0
  %1971 = vmatpush1.msra.mxu0 0.0
  %1972 = vmatprep.subr.mxu0 0.0
  %1973 = vmatpush1.msra.mxu0 0.0
  %1974 = vmatprep.subr.mxu0 0.0
  %1975 = vmatpush1.msra.mxu0 0.0
  %1976 = vmatprep.subr.mxu0 0.0
  %1977 = vmatpush1.msra.mxu0 0.0
  %1978 = vmatprep.subr.mxu0 0.0
  %1979 = vmatpush1.msra.mxu0 0.0
  %1980 = vmatprep.subr.mxu0 0.0
  %1981 = vmatpush1.msra.mxu0 0.0
  %1982 = vmatprep.subr.mxu0 0.0
  %1983 = vmatpush1.msra.mxu0 0.0
  %1984 = vmatprep.subr.mxu0 0.0
  %1985 = vmatpush1.msra.mxu0 0.0
  %1986 = vmatprep.subr.mxu0 0.0
  %1987 = vmatpush1.msra.mxu0 0.0
  %1988 = vmatprep.subr.mxu0 0.0
  %1989 = vmatpush1.msra.mxu0 0.0
  %1990 = vmatprep.subr.mxu0 0.0
  %1991 = vmatpush1.msra.mxu0 0.0
  %1992 = vmatprep.subr.mxu0 0.0
  %1993 = vmatpush1.msra.mxu0 0.0
  %1994 = vmatprep.subr.mxu0 0.0
  %1995 = vmatpush1.msra.mxu0 0.0
  %1996 = vmatprep.subr.mxu0 0.0
  %1997 = vmatpush1.msra.mxu0 0.0
  %1998 = vmatprep.subr.mxu0 0.0
  %1999 = vmatpush1.msra.mxu0 0.0
  %2000 = vmatprep.subr.mxu0 0.0
  %2001 = vmatpush1.msra.mxu0 0.0
  %2002 = vmatprep.subr.mxu0 0.0
  %2003 = vmatpush1.msra.mxu0 0.0
  %2004 = vmatprep.subr.mxu0 0.0
  %2005 = vmatpush1.msra.mxu0 0.0
  %2006 = vmatprep.subr.mxu0 0.0
  %2007 = vmatpush1.msra.mxu0 0.0
  %2008 = vmatprep.subr.mxu0 0.0
  %2009 = vmatpush1.msra.mxu0 0.0
  %2010 = vmatprep.subr.mxu0 0.0
  %2011 = vmatpush1.msra.mxu0 0.0
  %2012 = vmatprep.subr.mxu0 0.0
  %2013 = vmatpush1.msra.mxu0 0.0
  %2014 = vmatprep.mubr.f32.mxu0 0.0
  %2015 = vmatmul.mubr.f32.gmra.mrb[0].mxu0 %v1948
  %v2016 = vpop.f32.mrb[0].mxu0
  %v2017 = vadd.f32 0.0, %v2016
  %v2018 = vpop.f32.mrb[0].mxu0
  %2019 = vdwg.mxu0
  %v2021 = vsel %vm1104, %v1796, 0
  %2023 = vmatprep.subr.mxu0 0.0
  %2024 = vmatpush1.msra.mxu0 %v1101
  %2025 = vmatprep.subr.mxu0 0.0
  %2026 = vmatpush1.msra.mxu0 0.0
  %2027 = vmatprep.subr.mxu0 0.0
  %2028 = vmatpush1.msra.mxu0 0.0
  %2029 = vmatprep.subr.mxu0 0.0
  %2030 = vmatpush1.msra.mxu0 0.0
  %2031 = vmatprep.subr.mxu0 0.0
  %2032 = vmatpush1.msra.mxu0 0.0
  %2033 = vmatprep.subr.mxu0 0.0
  %2034 = vmatpush1.msra.mxu0 0.0
  %2035 = vmatprep.subr.mxu0 0.0
  %2036 = vmatpush1.msra.mxu0 0.0
  %2037 = vmatprep.subr.mxu0 0.0
  %2038 = vmatpush1.msra.mxu0 0.0
  %2039 = vmatprep.subr.mxu0 0.0
  %2040 = vmatpush1.msra.mxu0 0.0
  %2041 = vmatprep.subr.mxu0 0.0
  %2042 = vmatpush1.msra.mxu0 0.0
  %2043 = vmatprep.subr.mxu0 0.0
  %2044 = vmatpush1.msra.mxu0 0.0
  %2045 = vmatprep.subr.mxu0 0.0
  %2046 = vmatpush1.msra.mxu0 0.0
  %2047 = vmatprep.subr.mxu0 0.0
  %2048 = vmatpush1.msra.mxu0 0.0
  %2049 = vmatprep.subr.mxu0 0.0
  %2050 = vmatpush1.msra.mxu0 0.0
  %2051 = vmatprep.subr.mxu0 0.0
  %2052 = vmatpush1.msra.mxu0 0.0
  %2053 = vmatprep.subr.mxu0 0.0
  %2054 = vmatpush1.msra.mxu0 0.0
  %2055 = vmatprep.subr.mxu0 0.0
  %2056 = vmatpush1.msra.mxu0 0.0
  %2057 = vmatprep.subr.mxu0 0.0
  %2058 = vmatpush1.msra.mxu0 0.0
  %2059 = vmatprep.subr.mxu0 0.0
  %2060 = vmatpush1.msra.mxu0 0.0
  %2061 = vmatprep.subr.mxu0 0.0
  %2062 = vmatpush1.msra.mxu0 0.0
  %2063 = vmatprep.subr.mxu0 0.0
  %2064 = vmatpush1.msra.mxu0 0.0
  %2065 = vmatprep.subr.mxu0 0.0
  %2066 = vmatpush1.msra.mxu0 0.0
  %2067 = vmatprep.subr.mxu0 0.0
  %2068 = vmatpush1.msra.mxu0 0.0
  %2069 = vmatprep.subr.mxu0 0.0
  %2070 = vmatpush1.msra.mxu0 0.0
  %2071 = vmatprep.subr.mxu0 0.0
  %2072 = vmatpush1.msra.mxu0 0.0
  %2073 = vmatprep.subr.mxu0 0.0
  %2074 = vmatpush1.msra.mxu0 0.0
  %2075 = vmatprep.subr.mxu0 0.0
  %2076 = vmatpush1.msra.mxu0 0.0
  %2077 = vmatprep.subr.mxu0 0.0
  %2078 = vmatpush1.msra.mxu0 0.0
  %2079 = vmatprep.subr.mxu0 0.0
  %2080 = vmatpush1.msra.mxu0 0.0
  %2081 = vmatprep.subr.mxu0 0.0
  %2082 = vmatpush1.msra.mxu0 0.0
  %2083 = vmatprep.subr.mxu0 0.0
  %2084 = vmatpush1.msra.mxu0 0.0
  %2085 = vmatprep.subr.mxu0 0.0
  %2086 = vmatpush1.msra.mxu0 0.0
  %2087 = vmatprep.mubr.f32.mxu0 0.0
  %2088 = vmatmul.mubr.f32.gmra.mrb[0].mxu0 %v2021
  %v2089 = vpop.f32.mrb[0].mxu0
  %v2090 = vadd.f32 0.0, %v2089
  %v2091 = vpop.f32.mrb[0].mxu0
  %2092 = vdwg.mxu0
  %v2094 = vsel %vm1104, %v1797, 0
  %2096 = vmatprep.subr.mxu0 0.0
  %2097 = vmatpush1.msra.mxu0 %v1034
  %2098 = vmatprep.subr.mxu0 0.0
  %2099 = vmatpush1.msra.mxu0 0.0
  %2100 = vmatprep.subr.mxu0 0.0
  %2101 = vmatpush1.msra.mxu0 0.0
  %2102 = vmatprep.subr.mxu0 0.0
  %2103 = vmatpush1.msra.mxu0 0.0
  %2104 = vmatprep.subr.mxu0 0.0
  %2105 = vmatpush1.msra.mxu0 0.0
  %2106 = vmatprep.subr.mxu0 0.0
  %2107 = vmatpush1.msra.mxu0 0.0
  %2108 = vmatprep.subr.mxu0 0.0
  %2109 = vmatpush1.msra.mxu0 0.0
  %2110 = vmatprep.subr.mxu0 0.0
  %2111 = vmatpush1.msra.mxu0 0.0
  %2112 = vmatprep.subr.mxu0 0.0
  %2113 = vmatpush1.msra.mxu0 0.0
  %2114 = vmatprep.subr.mxu0 0.0
  %2115 = vmatpush1.msra.mxu0 0.0
  %2116 = vmatprep.subr.mxu0 0.0
  %2117 = vmatpush1.msra.mxu0 0.0
  %2118 = vmatprep.subr.mxu0 0.0
  %2119 = vmatpush1.msra.mxu0 0.0
  %2120 = vmatprep.subr.mxu0 0.0
  %2121 = vmatpush1.msra.mxu0 0.0
  %2122 = vmatprep.subr.mxu0 0.0
  %2123 = vmatpush1.msra.mxu0 0.0
  %2124 = vmatprep.subr.mxu0 0.0
  %2125 = vmatpush1.msra.mxu0 0.0
  %2126 = vmatprep.subr.mxu0 0.0
  %2127 = vmatpush1.msra.mxu0 0.0
  %2128 = vmatprep.subr.mxu0 0.0
  %2129 = vmatpush1.msra.mxu0 0.0
  %2130 = vmatprep.subr.mxu0 0.0
  %2131 = vmatpush1.msra.mxu0 0.0
  %2132 = vmatprep.subr.mxu0 0.0
  %2133 = vmatpush1.msra.mxu0 0.0
  %2134 = vmatprep.subr.mxu0 0.0
  %2135 = vmatpush1.msra.mxu0 0.0
  %2136 = vmatprep.subr.mxu0 0.0
  %2137 = vmatpush1.msra.mxu0 0.0
  %2138 = vmatprep.subr.mxu0 0.0
  %2139 = vmatpush1.msra.mxu0 0.0
  %2140 = vmatprep.subr.mxu0 0.0
  %2141 = vmatpush1.msra.mxu0 0.0
  %2142 = vmatprep.subr.mxu0 0.0
  %2143 = vmatpush1.msra.mxu0 0.0
  %2144 = vmatprep.subr.mxu0 0.0
  %2145 = vmatpush1.msra.mxu0 0.0
  %2146 = vmatprep.subr.mxu0 0.0
  %2147 = vmatpush1.msra.mxu0 0.0
  %2148 = vmatprep.subr.mxu0 0.0
  %2149 = vmatpush1.msra.mxu0 0.0
  %2150 = vmatprep.subr.mxu0 0.0
  %2151 = vmatpush1.msra.mxu0 0.0
  %2152 = vmatprep.subr.mxu0 0.0
  %2153 = vmatpush1.msra.mxu0 0.0
  %2154 = vmatprep.subr.mxu0 0.0
  %2155 = vmatpush1.msra.mxu0 0.0
  %2156 = vmatprep.subr.mxu0 0.0
  %2157 = vmatpush1.msra.mxu0 0.0
  %2158 = vmatprep.subr.mxu0 0.0
  %2159 = vmatpush1.msra.mxu0 0.0
  %2160 = vmatprep.mubr.f32.mxu0 0.0
  %2161 = vmatmul.mubr.f32.gmra.mrb[0].mxu0 %v2094
  %v2162 = vpop.f32.mrb[0].mxu0
  %v2163 = vadd.f32 0.0, %v2162
  %v2164 = vpop.f32.mrb[0].mxu0
  %2165 = vdwg.mxu0
  %v2167 = vsel %vm1104, %v1798, 0
  %2169 = vmatprep.subr.mxu0 0.0
  %2170 = vmatpush1.msra.mxu0 %v1102
  %2171 = vmatprep.subr.mxu0 0.0
  %2172 = vmatpush1.msra.mxu0 0.0
  %2173 = vmatprep.subr.mxu0 0.0
  %2174 = vmatpush1.msra.mxu0 0.0
  %2175 = vmatprep.subr.mxu0 0.0
  %2176 = vmatpush1.msra.mxu0 0.0
  %2177 = vmatprep.subr.mxu0 0.0
  %2178 = vmatpush1.msra.mxu0 0.0
  %2179 = vmatprep.subr.mxu0 0.0
  %2180 = vmatpush1.msra.mxu0 0.0
  %2181 = vmatprep.subr.mxu0 0.0
  %2182 = vmatpush1.msra.mxu0 0.0
  %2183 = vmatprep.subr.mxu0 0.0
  %2184 = vmatpush1.msra.mxu0 0.0
  %2185 = vmatprep.subr.mxu0 0.0
  %2186 = vmatpush1.msra.mxu0 0.0
  %2187 = vmatprep.subr.mxu0 0.0
  %2188 = vmatpush1.msra.mxu0 0.0
  %2189 = vmatprep.subr.mxu0 0.0
  %2190 = vmatpush1.msra.mxu0 0.0
  %2191 = vmatprep.subr.mxu0 0.0
  %2192 = vmatpush1.msra.mxu0 0.0
  %2193 = vmatprep.subr.mxu0 0.0
  %2194 = vmatpush1.msra.mxu0 0.0
  %2195 = vmatprep.subr.mxu0 0.0
  %2196 = vmatpush1.msra.mxu0 0.0
  %2197 = vmatprep.subr.mxu0 0.0
  %2198 = vmatpush1.msra.mxu0 0.0
  %2199 = vmatprep.subr.mxu0 0.0
  %2200 = vmatpush1.msra.mxu0 0.0
  %2201 = vmatprep.subr.mxu0 0.0
  %2202 = vmatpush1.msra.mxu0 0.0
  %2203 = vmatprep.subr.mxu0 0.0
  %2204 = vmatpush1.msra.mxu0 0.0
  %2205 = vmatprep.subr.mxu0 0.0
  %2206 = vmatpush1.msra.mxu0 0.0
  %2207 = vmatprep.subr.mxu0 0.0
  %2208 = vmatpush1.msra.mxu0 0.0
  %2209 = vmatprep.subr.mxu0 0.0
  %2210 = vmatpush1.msra.mxu0 0.0
  %2211 = vmatprep.subr.mxu0 0.0
  %2212 = vmatpush1.msra.mxu0 0.0
  %2213 = vmatprep.subr.mxu0 0.0
  %2214 = vmatpush1.msra.mxu0 0.0
  %2215 = vmatprep.subr.mxu0 0.0
  %2216 = vmatpush1.msra.mxu0 0.0
  %2217 = vmatprep.subr.mxu0 0.0
  %2218 = vmatpush1.msra.mxu0 0.0
  %2219 = vmatprep.subr.mxu0 0.0
  %2220 = vmatpush1.msra.mxu0 0.0
  %2221 = vmatprep.subr.mxu0 0.0
  %2222 = vmatpush1.msra.mxu0 0.0
  %2223 = vmatprep.subr.mxu0 0.0
  %2224 = vmatpush1.msra.mxu0 0.0
  %2225 = vmatprep.subr.mxu0 0.0
  %2226 = vmatpush1.msra.mxu0 0.0
  %2227 = vmatprep.subr.mxu0 0.0
  %2228 = vmatpush1.msra.mxu0 0.0
  %2229 = vmatprep.subr.mxu0 0.0
  %2230 = vmatpush1.msra.mxu0 0.0
  %2231 = vmatprep.subr.mxu0 0.0
  %2232 = vmatpush1.msra.mxu0 0.0
  %2233 = vmatprep.mubr.f32.mxu0 0.0
  %2234 = vmatmul.mubr.f32.gmra.mrb[0].mxu0 %v2167
  %v2235 = vpop.f32.mrb[0].mxu0
  %v2236 = vadd.f32 0.0, %v2235
  %v2237 = vpop.f32.mrb[0].mxu0
  %2238 = vdwg.mxu0
  %v2240 = vsel %vm1104, %v1799, 0
  %2242 = vmatprep.subr.mxu0 0.0
  %2243 = vmatpush1.msra.mxu0 %v1035
  %2244 = vmatprep.subr.mxu0 0.0
  %2245 = vmatpush1.msra.mxu0 0.0
  %2246 = vmatprep.subr.mxu0 0.0
  %2247 = vmatpush1.msra.mxu0 0.0
  %2248 = vmatprep.subr.mxu0 0.0
  %2249 = vmatpush1.msra.mxu0 0.0
  %2250 = vmatprep.subr.mxu0 0.0
  %2251 = vmatpush1.msra.mxu0 0.0
  %2252 = vmatprep.subr.mxu0 0.0
  %2253 = vmatpush1.msra.mxu0 0.0
  %2254 = vmatprep.subr.mxu0 0.0
  %2255 = vmatpush1.msra.mxu0 0.0
  %2256 = vmatprep.subr.mxu0 0.0
  %2257 = vmatpush1.msra.mxu0 0.0
  %2258 = vmatprep.subr.mxu0 0.0
  %2259 = vmatpush1.msra.mxu0 0.0
  %2260 = vmatprep.subr.mxu0 0.0
  %2261 = vmatpush1.msra.mxu0 0.0
  %2262 = vmatprep.subr.mxu0 0.0
  %2263 = vmatpush1.msra.mxu0 0.0
  %2264 = vmatprep.subr.mxu0 0.0
  %2265 = vmatpush1.msra.mxu0 0.0
  %2266 = vmatprep.subr.mxu0 0.0
  %2267 = vmatpush1.msra.mxu0 0.0
  %2268 = vmatprep.subr.mxu0 0.0
  %2269 = vmatpush1.msra.mxu0 0.0
  %2270 = vmatprep.subr.mxu0 0.0
  %2271 = vmatpush1.msra.mxu0 0.0
  %2272 = vmatprep.subr.mxu0 0.0
  %2273 = vmatpush1.msra.mxu0 0.0
  %2274 = vmatprep.subr.mxu0 0.0
  %2275 = vmatpush1.msra.mxu0 0.0
  %2276 = vmatprep.subr.mxu0 0.0
  %2277 = vmatpush1.msra.mxu0 0.0
  %2278 = vmatprep.subr.mxu0 0.0
  %2279 = vmatpush1.msra.mxu0 0.0
  %2280 = vmatprep.subr.mxu0 0.0
  %2281 = vmatpush1.msra.mxu0 0.0
  %2282 = vmatprep.subr.mxu0 0.0
  %2283 = vmatpush1.msra.mxu0 0.0
  %2284 = vmatprep.subr.mxu0 0.0
  %2285 = vmatpush1.msra.mxu0 0.0
  %2286 = vmatprep.subr.mxu0 0.0
  %2287 = vmatpush1.msra.mxu0 0.0
  %2288 = vmatprep.subr.mxu0 0.0
  %2289 = vmatpush1.msra.mxu0 0.0
  %2290 = vmatprep.subr.mxu0 0.0
  %2291 = vmatpush1.msra.mxu0 0.0
  %2292 = vmatprep.subr.mxu0 0.0
  %2293 = vmatpush1.msra.mxu0 0.0
  %2294 = vmatprep.subr.mxu0 0.0
  %2295 = vmatpush1.msra.mxu0 0.0
  %2296 = vmatprep.subr.mxu0 0.0
  %2297 = vmatpush1.msra.mxu0 0.0
  %2298 = vmatprep.subr.mxu0 0.0
  %2299 = vmatpush1.msra.mxu0 0.0
  %2300 = vmatprep.subr.mxu0 0.0
  %2301 = vmatpush1.msra.mxu0 0.0
  %2302 = vmatprep.subr.mxu0 0.0
  %2303 = vmatpush1.msra.mxu0 0.0
  %2304 = vmatprep.subr.mxu0 0.0
  %2305 = vmatpush1.msra.mxu0 0.0
  %2306 = vmatprep.mubr.f32.mxu0 0.0
  %2307 = vmatmul.mubr.f32.gmra.mrb[0].mxu0 %v2240
  %v2308 = vpop.f32.mrb[0].mxu0
  %v2309 = vadd.f32 0.0, %v2308
  %v2310 = vpop.f32.mrb[0].mxu0
  %2311 = vdwg.mxu0
  %v2313 = vsel %vm1104, %v1800, 0
  %2315 = vmatprep.subr.mxu0 0.0
  %2316 = vmatpush1.msra.mxu0 %v1103
  %2317 = vmatprep.subr.mxu0 0.0
  %2318 = vmatpush1.msra.mxu0 0.0
  %2319 = vmatprep.subr.mxu0 0.0
  %2320 = vmatpush1.msra.mxu0 0.0
  %2321 = vmatprep.subr.mxu0 0.0
  %2322 = vmatpush1.msra.mxu0 0.0
  %2323 = vmatprep.subr.mxu0 0.0
  %2324 = vmatpush1.msra.mxu0 0.0
  %2325 = vmatprep.subr.mxu0 0.0
  %2326 = vmatpush1.msra.mxu0 0.0
  %2327 = vmatprep.subr.mxu0 0.0
  %2328 = vmatpush1.msra.mxu0 0.0
  %2329 = vmatprep.subr.mxu0 0.0
  %2330 = vmatpush1.msra.mxu0 0.0
  %2331 = vmatprep.subr.mxu0 0.0
  %2332 = vmatpush1.msra.mxu0 0.0
  %2333 = vmatprep.subr.mxu0 0.0
  %2334 = vmatpush1.msra.mxu0 0.0
  %2335 = vmatprep.subr.mxu0 0.0
  %2336 = vmatpush1.msra.mxu0 0.0
  %2337 = vmatprep.subr.mxu0 0.0
  %2338 = vmatpush1.msra.mxu0 0.0
  %2339 = vmatprep.subr.mxu0 0.0
  %2340 = vmatpush1.msra.mxu0 0.0
  %2341 = vmatprep.subr.mxu0 0.0
  %2342 = vmatpush1.msra.mxu0 0.0
  %2343 = vmatprep.subr.mxu0 0.0
  %2344 = vmatpush1.msra.mxu0 0.0
  %2345 = vmatprep.subr.mxu0 0.0
  %2346 = vmatpush1.msra.mxu0 0.0
  %2347 = vmatprep.subr.mxu0 0.0
  %2348 = vmatpush1.msra.mxu0 0.0
  %2349 = vmatprep.subr.mxu0 0.0
  %2350 = vmatpush1.msra.mxu0 0.0
  %2351 = vmatprep.subr.mxu0 0.0
  %2352 = vmatpush1.msra.mxu0 0.0
  %2353 = vmatprep.subr.mxu0 0.0
  %2354 = vmatpush1.msra.mxu0 0.0
  %2355 = vmatprep.subr.mxu0 0.0
  %2356 = vmatpush1.msra.mxu0 0.0
  %2357 = vmatprep.subr.mxu0 0.0
  %2358 = vmatpush1.msra.mxu0 0.0
  %2359 = vmatprep.subr.mxu0 0.0
  %2360 = vmatpush1.msra.mxu0 0.0
  %2361 = vmatprep.subr.mxu0 0.0
  %2362 = vmatpush1.msra.mxu0 0.0
  %2363 = vmatprep.subr.mxu0 0.0
  %2364 = vmatpush1.msra.mxu0 0.0
  %2365 = vmatprep.subr.mxu0 0.0
  %2366 = vmatpush1.msra.mxu0 0.0
  %2367 = vmatprep.subr.mxu0 0.0
  %2368 = vmatpush1.msra.mxu0 0.0
  %2369 = vmatprep.subr.mxu0 0.0
  %2370 = vmatpush1.msra.mxu0 0.0
  %2371 = vmatprep.subr.mxu0 0.0
  %2372 = vmatpush1.msra.mxu0 0.0
  %2373 = vmatprep.subr.mxu0 0.0
  %2374 = vmatpush1.msra.mxu0 0.0
  %2375 = vmatprep.subr.mxu0 0.0
  %2376 = vmatpush1.msra.mxu0 0.0
  %2377 = vmatprep.subr.mxu0 0.0
  %2378 = vmatpush1.msra.mxu0 0.0
  %2379 = vmatprep.mubr.f32.mxu0 0.0
  %2380 = vmatmul.mubr.f32.gmra.mrb[0].mxu0 %v2313
  %v2381 = vpop.f32.mrb[0].mxu0
  %v2382 = vadd.f32 0.0, %v2381
  %v2383 = vpop.f32.mrb[0].mxu0
  %2384 = vdwg.mxu0
  %v2385 = vcombine.low %v1871, %v2163
  %v2386 = vcombine.high %v1871, %v2163
  %v2388 = vunpack.c.l.s4 1983009808
  %v2389 = vunpack.c.0.s8 %v2388
  %v2390 = vlaneseq
  %v2391 = vshrl.u32 %v2390, 7
  %v2392 = vsub.s32 %v2389, %v2391
  %v2393 = vrot.slane %v2385, %v2392
  %v2395 = vunpack.c.l.s4 1983009808
  %v2396 = vunpack.c.0.s8 %v2395
  %v2397 = vlaneseq
  %v2398 = vshrl.u32 %v2397, 7
  %v2399 = vsub.s32 %v2396, %v2398
  %v2400 = vrot.slane %v2386, %v2399
  %v2401 = vcombine.low %v2017, %v2309
  %v2402 = vcombine.high %v2017, %v2309
  %v2404 = vunpack.c.l.s4 1983009808
  %v2405 = vunpack.c.0.s8 %v2404
  %v2406 = vlaneseq
  %v2407 = vshrl.u32 %v2406, 7
  %v2408 = vsub.s32 %v2405, %v2407
  %v2409 = vrot.slane %v2401, %v2408
  %v2411 = vunpack.c.l.s4 1983009808
  %v2412 = vunpack.c.0.s8 %v2411
  %v2413 = vlaneseq
  %v2414 = vshrl.u32 %v2413, 7
  %v2415 = vsub.s32 %v2412, %v2414
  %v2416 = vrot.slane %v2402, %v2415
  %v2417 = vcombine.low %v2393, %v2409
  %v2418 = vcombine.high %v2393, %v2409
  %v2420 = vunpack.c.l.s4 1934713408
  %v2421 = vunpack.c.0.s8 %v2420
  %v2422 = vlaneseq
  %v2423 = vshrl.u32 %v2422, 7
  %v2424 = vsub.s32 %v2421, %v2423
  %v2425 = vrot.slane %v2417, %v2424
  %v2427 = vunpack.c.l.s4 1934713408
  %v2428 = vunpack.c.0.s8 %v2427
  %v2429 = vlaneseq
  %v2430 = vshrl.u32 %v2429, 7
  %v2431 = vsub.s32 %v2428, %v2430
  %v2432 = vrot.slane %v2418, %v2431
  %v2433 = vcombine.low %v2400, %v2416
  %v2434 = vcombine.high %v2400, %v2416
  %v2436 = vunpack.c.l.s4 1934713408
  %v2437 = vunpack.c.0.s8 %v2436
  %v2438 = vlaneseq
  %v2439 = vshrl.u32 %v2438, 7
  %v2440 = vsub.s32 %v2437, %v2439
  %v2441 = vrot.slane %v2433, %v2440
  %v2443 = vunpack.c.l.s4 1934713408
  %v2444 = vunpack.c.0.s8 %v2443
  %v2445 = vlaneseq
  %v2446 = vshrl.u32 %v2445, 7
  %v2447 = vsub.s32 %v2444, %v2446
  %v2448 = vrot.slane %v2434, %v2447
  %v2449 = vcombine.high %v2425, 0.0
  %v2450 = vcombine.high %v2432, 0.0
  %v2451 = vcombine.high %v2441, 0.0
  %v2452 = vcombine.high %v2448, 0.0
  %v2453 = vcombine.low %v1944, %v2236
  %v2454 = vcombine.high %v1944, %v2236
  %v2456 = vunpack.c.l.s4 1983009808
  %v2457 = vunpack.c.0.s8 %v2456
  %v2458 = vlaneseq
  %v2459 = vshrl.u32 %v2458, 7
  %v2460 = vsub.s32 %v2457, %v2459
  %v2461 = vrot.slane %v2453, %v2460
  %v2463 = vunpack.c.l.s4 1983009808
  %v2464 = vunpack.c.0.s8 %v2463
  %v2465 = vlaneseq
  %v2466 = vshrl.u32 %v2465, 7
  %v2467 = vsub.s32 %v2464, %v2466
  %v2468 = vrot.slane %v2454, %v2467
  %v2469 = vcombine.low %v2090, %v2382
  %v2470 = vcombine.high %v2090, %v2382
  %v2472 = vunpack.c.l.s4 1983009808
  %v2473 = vunpack.c.0.s8 %v2472
  %v2474 = vlaneseq
  %v2475 = vshrl.u32 %v2474, 7
  %v2476 = vsub.s32 %v2473, %v2475
  %v2477 = vrot.slane %v2469, %v2476
  %v2479 = vunpack.c.l.s4 1983009808
  %v2480 = vunpack.c.0.s8 %v2479
  %v2481 = vlaneseq
  %v2482 = vshrl.u32 %v2481, 7
  %v2483 = vsub.s32 %v2480, %v2482
  %v2484 = vrot.slane %v2470, %v2483
  %v2485 = vcombine.low %v2461, %v2477
  %v2486 = vcombine.high %v2461, %v2477
  %v2488 = vunpack.c.l.s4 1934713408
  %v2489 = vunpack.c.0.s8 %v2488
  %v2490 = vlaneseq
  %v2491 = vshrl.u32 %v2490, 7
  %v2492 = vsub.s32 %v2489, %v2491
  %v2493 = vrot.slane %v2485, %v2492
  %v2495 = vunpack.c.l.s4 1934713408
  %v2496 = vunpack.c.0.s8 %v2495
  %v2497 = vlaneseq
  %v2498 = vshrl.u32 %v2497, 7
  %v2499 = vsub.s32 %v2496, %v2498
  %v2500 = vrot.slane %v2486, %v2499
  %v2501 = vcombine.low %v2468, %v2484
  %v2502 = vcombine.high %v2468, %v2484
  %v2504 = vunpack.c.l.s4 1934713408
  %v2505 = vunpack.c.0.s8 %v2504
  %v2506 = vlaneseq
  %v2507 = vshrl.u32 %v2506, 7
  %v2508 = vsub.s32 %v2505, %v2507
  %v2509 = vrot.slane %v2501, %v2508
  %v2511 = vunpack.c.l.s4 1934713408
  %v2512 = vunpack.c.0.s8 %v2511
  %v2513 = vlaneseq
  %v2514 = vshrl.u32 %v2513, 7
  %v2515 = vsub.s32 %v2512, %v2514
  %v2516 = vrot.slane %v2502, %v2515
  %v2517 = vcombine.high %v2493, 0.0
  %v2518 = vcombine.high %v2500, 0.0
  %v2519 = vcombine.high %v2509, 0.0
  %v2520 = vcombine.high %v2516, 0.0
  %v2521 = vcombine.low %v2425, %v2432
  %v2523 = vunpack.c.l.s4 1983009808
  %v2524 = vunpack.c.0.s8 %v2523
  %v2525 = vlaneseq
  %v2526 = vshrl.u32 %v2525, 7
  %v2527 = vsub.s32 %v2524, %v2526
  %v2528 = vrot.slane %v2521, %v2527
  %v2529 = vcombine.low %v2449, %v2450
  %v2531 = vunpack.c.l.s4 1983009808
  %v2532 = vunpack.c.0.s8 %v2531
  %v2533 = vlaneseq
  %v2534 = vshrl.u32 %v2533, 7
  %v2535 = vsub.s32 %v2532, %v2534
  %v2536 = vrot.slane %v2529, %v2535
  %v2537 = vcombine.low %v2441, %v2448
  %v2539 = vunpack.c.l.s4 1983009808
  %v2540 = vunpack.c.0.s8 %v2539
  %v2541 = vlaneseq
  %v2542 = vshrl.u32 %v2541, 7
  %v2543 = vsub.s32 %v2540, %v2542
  %v2544 = vrot.slane %v2537, %v2543
  %v2545 = vcombine.low %v2451, %v2452
  %v2547 = vunpack.c.l.s4 1983009808
  %v2548 = vunpack.c.0.s8 %v2547
  %v2549 = vlaneseq
  %v2550 = vshrl.u32 %v2549, 7
  %v2551 = vsub.s32 %v2548, %v2550
  %v2552 = vrot.slane %v2545, %v2551
  %v2553 = vcombine.low %v2528, %v2536
  %v2554 = vcombine.high %v2528, %v2536
  %v2556 = vunpack.c.l.s4 1934713408
  %v2557 = vunpack.c.0.s8 %v2556
  %v2558 = vlaneseq
  %v2559 = vshrl.u32 %v2558, 7
  %v2560 = vsub.s32 %v2557, %v2559
  %v2561 = vrot.slane %v2553, %v2560
  %v2563 = vunpack.c.l.s4 1934713408
  %v2564 = vunpack.c.0.s8 %v2563
  %v2565 = vlaneseq
  %v2566 = vshrl.u32 %v2565, 7
  %v2567 = vsub.s32 %v2564, %v2566
  %v2568 = vrot.slane %v2554, %v2567
  %v2569 = vcombine.low %v2544, %v2552
  %v2570 = vcombine.high %v2544, %v2552
  %v2572 = vunpack.c.l.s4 1934713408
  %v2573 = vunpack.c.0.s8 %v2572
  %v2574 = vlaneseq
  %v2575 = vshrl.u32 %v2574, 7
  %v2576 = vsub.s32 %v2573, %v2575
  %v2577 = vrot.slane %v2569, %v2576
  %v2579 = vunpack.c.l.s4 1934713408
  %v2580 = vunpack.c.0.s8 %v2579
  %v2581 = vlaneseq
  %v2582 = vshrl.u32 %v2581, 7
  %v2583 = vsub.s32 %v2580, %v2582
  %v2584 = vrot.slane %v2570, %v2583
  %v2585 = vcombine.low %v2561, %v2577
  %v2586 = vcombine.high %v2561, %v2577
  %v2587 = vcombine.low %v2568, %v2584
  %v2588 = vcombine.high %v2568, %v2584
  %v2589 = vcombine.low %v2493, %v2500
  %v2591 = vunpack.c.l.s4 1983009808
  %v2592 = vunpack.c.0.s8 %v2591
  %v2593 = vlaneseq
  %v2594 = vshrl.u32 %v2593, 7
  %v2595 = vsub.s32 %v2592, %v2594
  %v2596 = vrot.slane %v2589, %v2595
  %v2597 = vcombine.low %v2517, %v2518
  %v2599 = vunpack.c.l.s4 1983009808
  %v2600 = vunpack.c.0.s8 %v2599
  %v2601 = vlaneseq
  %v2602 = vshrl.u32 %v2601, 7
  %v2603 = vsub.s32 %v2600, %v2602
  %v2604 = vrot.slane %v2597, %v2603
  %v2605 = vcombine.low %v2509, %v2516
  %v2607 = vunpack.c.l.s4 1983009808
  %v2608 = vunpack.c.0.s8 %v2607
  %v2609 = vlaneseq
  %v2610 = vshrl.u32 %v2609, 7
  %v2611 = vsub.s32 %v2608, %v2610
  %v2612 = vrot.slane %v2605, %v2611
  %v2613 = vcombine.low %v2519, %v2520
  %v2615 = vunpack.c.l.s4 1983009808
  %v2616 = vunpack.c.0.s8 %v2615
  %v2617 = vlaneseq
  %v2618 = vshrl.u32 %v2617, 7
  %v2619 = vsub.s32 %v2616, %v2618
  %v2620 = vrot.slane %v2613, %v2619
  %v2621 = vcombine.low %v2596, %v2604
  %v2622 = vcombine.high %v2596, %v2604
  %v2624 = vunpack.c.l.s4 1934713408
  %v2625 = vunpack.c.0.s8 %v2624
  %v2626 = vlaneseq
  %v2627 = vshrl.u32 %v2626, 7
  %v2628 = vsub.s32 %v2625, %v2627
  %v2629 = vrot.slane %v2621, %v2628
  %v2631 = vunpack.c.l.s4 1934713408
  %v2632 = vunpack.c.0.s8 %v2631
  %v2633 = vlaneseq
  %v2634 = vshrl.u32 %v2633, 7
  %v2635 = vsub.s32 %v2632, %v2634
  %v2636 = vrot.slane %v2622, %v2635
  %v2637 = vcombine.low %v2612, %v2620
  %v2638 = vcombine.high %v2612, %v2620
  %v2640 = vunpack.c.l.s4 1934713408
  %v2641 = vunpack.c.0.s8 %v2640
  %v2642 = vlaneseq
  %v2643 = vshrl.u32 %v2642, 7
  %v2644 = vsub.s32 %v2641, %v2643
  %v2645 = vrot.slane %v2637, %v2644
  %v2647 = vunpack.c.l.s4 1934713408
  %v2648 = vunpack.c.0.s8 %v2647
  %v2649 = vlaneseq
  %v2650 = vshrl.u32 %v2649, 7
  %v2651 = vsub.s32 %v2648, %v2650
  %v2652 = vrot.slane %v2638, %v2651
  %v2653 = vcombine.low %v2629, %v2645
  %v2654 = vcombine.high %v2629, %v2645
  %v2655 = vcombine.low %v2636, %v2652
  %v2656 = vcombine.high %v2636, %v2652
  %2659 = vrot.lane.b32.xlu0 %v2586, 8
  %v2660 = vpop.permute.xlu0 %2659
  %2661 = vrot.lane.b32.xlu0 %v2654, 8
  %v2662 = vpop.permute.xlu0 %2661
  %2667 = vrot.lane.b32.xlu0 %v2587, 16
  %v2668 = vpop.permute.xlu0 %2667
  %2669 = vrot.lane.b32.xlu0 %v2655, 16
  %v2670 = vpop.permute.xlu0 %2669
  %2675 = vrot.lane.b32.xlu0 %v2588, 24
  %v2676 = vpop.permute.xlu0 %2675
  %2677 = vrot.lane.b32.xlu0 %v2656, 24
  %v2678 = vpop.permute.xlu0 %2677
  %v2681 = vsel %vm1104, %v2585, %v2660
  %v2682 = vsel %vm1104, %v2653, %v2662
  %vm2683 = vcmask 130048
  %v2684 = vsel %vm2683, %v2681, %v2668
  %v2685 = vsel %vm2683, %v2682, %v2670
  %vm2686 = vcmask 195584
  %v2687 = vsel %vm2686, %v2684, %v2676
  %v2688 = vsel %vm2686, %v2685, %v2678
  %v2689 = vld [vmem:[%s4] sm:$0xff]
  %v2690 = vld [vmem:[%s4 + $0x8] sm:$0xff]
  %v2691 = vld [vmem:[%s4 + $0x10] sm:$0xff]
  %v2692 = vld [vmem:[%s4 + $0x18] sm:$0xff]
  %v2693 = vlaneseq
  %v2694 = vshrl.u32 %v2693, 7
  %v2695 = vsub.s32 1, %v2694
  %v2696 = vrot.slane %v41, %v2695
  %v2698 = vsel %vm53, %v2687, 0
  %v2701 = vsel %vm53, %v2688, 0
  %2703 = vmatprep.subr.mxu0 0.0
  %2704 = vmatpush1.msra.mxu0 %v2689
  %2705 = vmatprep.subr.mxu0 0.0
  %2706 = vmatpush1.msra.mxu0 %v2690
  %2707 = vmatprep.subr.mxu0 0.0
  %2708 = vmatpush1.msra.mxu0 %v2691
  %2709 = vmatprep.subr.mxu0 0.0
  %2710 = vmatpush1.msra.mxu0 %v2692
  %2711 = vmatprep.subr.mxu0 0.0
  %2712 = vmatpush1.msra.mxu0 0.0
  %2713 = vmatprep.subr.mxu0 0.0
  %2714 = vmatpush1.msra.mxu0 0.0
  %2715 = vmatprep.subr.mxu0 0.0
  %2716 = vmatpush1.msra.mxu0 0.0
  %2717 = vmatprep.subr.mxu0 0.0
  %2718 = vmatpush1.msra.mxu0 0.0
  %2719 = vmatprep.subr.mxu0 0.0
  %2720 = vmatpush1.msra.mxu0 0.0
  %2721 = vmatprep.subr.mxu0 0.0
  %2722 = vmatpush1.msra.mxu0 0.0
  %2723 = vmatprep.subr.mxu0 0.0
  %2724 = vmatpush1.msra.mxu0 0.0
  %2725 = vmatprep.subr.mxu0 0.0
  %2726 = vmatpush1.msra.mxu0 0.0
  %2727 = vmatprep.subr.mxu0 0.0
  %2728 = vmatpush1.msra.mxu0 0.0
  %2729 = vmatprep.subr.mxu0 0.0
  %2730 = vmatpush1.msra.mxu0 0.0
  %2731 = vmatprep.subr.mxu0 0.0
  %2732 = vmatpush1.msra.mxu0 0.0
  %2733 = vmatprep.subr.mxu0 0.0
  %2734 = vmatpush1.msra.mxu0 0.0
  %2735 = vmatprep.subr.mxu0 0.0
  %2736 = vmatpush1.msra.mxu0 0.0
  %2737 = vmatprep.subr.mxu0 0.0
  %2738 = vmatpush1.msra.mxu0 0.0
  %2739 = vmatprep.subr.mxu0 0.0
  %2740 = vmatpush1.msra.mxu0 0.0
  %2741 = vmatprep.subr.mxu0 0.0
  %2742 = vmatpush1.msra.mxu0 0.0
  %2743 = vmatprep.subr.mxu0 0.0
  %2744 = vmatpush1.msra.mxu0 0.0
  %2745 = vmatprep.subr.mxu0 0.0
  %2746 = vmatpush1.msra.mxu0 0.0
  %2747 = vmatprep.subr.mxu0 0.0
  %2748 = vmatpush1.msra.mxu0 0.0
  %2749 = vmatprep.subr.mxu0 0.0
  %2750 = vmatpush1.msra.mxu0 0.0
  %2751 = vmatprep.subr.mxu0 0.0
  %2752 = vmatpush1.msra.mxu0 0.0
  %2753 = vmatprep.subr.mxu0 0.0
  %2754 = vmatpush1.msra.mxu0 0.0
  %2755 = vmatprep.subr.mxu0 0.0
  %2756 = vmatpush1.msra.mxu0 0.0
  %2757 = vmatprep.subr.mxu0 0.0
  %2758 = vmatpush1.msra.mxu0 0.0
  %2759 = vmatprep.subr.mxu0 0.0
  %2760 = vmatpush1.msra.mxu0 0.0
  %2761 = vmatprep.subr.mxu0 0.0
  %2762 = vmatpush1.msra.mxu0 0.0
  %2763 = vmatprep.subr.mxu0 0.0
  %2764 = vmatpush1.msra.mxu0 0.0
  %2765 = vmatprep.subr.mxu0 0.0
  %2766 = vmatpush1.msra.mxu0 0.0
  %2767 = vmatprep.mubr.f32.mxu0 0.0
  %2768 = vmatmul.mubr.f32.gmra.mrb[0].mxu0 %v2698
  %v2769 = vpop.f32.mrb[0].mxu0
  %v2770 = vadd.f32 %v2696, %v2769
  %v2771 = vpop.f32.mrb[0].mxu0
  %2772 = vmatprep.mubr.f32.mxu0 0.0
  %2773 = vmatmul.mubr.f32.gmra.mrb[0].mxu0 %v2701
  %v2774 = vpop.f32.mrb[0].mxu0
  %v2775 = vadd.f32 %v2696, %v2774
  %v2776 = vpop.f32.mrb[0].mxu0
  %2777 = vdwg.mxu0
  %v2778 = vadd.f32 %v35, %v2770
  %v2779 = vadd.f32 %v36, %v2775
  %v2780 = vsel %vm53, %v2778, 0.0
  %2781 = vadd.xlane.f32.xlu0 %v2780
  %v2782 = vpop.xlane.xlu0 %2781
  %v2783 = vsel %vm53, %v2779, 0.0
  %2784 = vadd.xlane.f32.xlu0 %v2783
  %v2785 = vpop.xlane.xlu0 %2784
  %v2786 = vrcp.pop 32.0
  %v2787 = vmul.f32 %v2782, %v2786
  %v2788 = vmul.f32 %v2785, %v2786
  %v2789 = vsub.f32 %v2778, %v2787
  %v2790 = vsub.f32 %v2779, %v2788
  %v2791 = vmul.f32 %v2789, %v2789
  %v2792 = vmul.f32 %v2790, %v2790
  %v2793 = vsel %vm53, %v2791, 0.0
  %2794 = vadd.xlane.f32.xlu0 %v2793
  %v2795 = vpop.xlane.xlu0 %2794
  %v2796 = vsel %vm53, %v2792, 0.0
  %2797 = vadd.xlane.f32.xlu0 %v2796
  %v2798 = vpop.xlane.xlu0 %2797
  %v2799 = vmul.f32 %v2795, %v2786
  %v2800 = vmul.f32 %v2798, %v2786
  %v2801 = vadd.f32 %v2799, 1e-05
  %v2802 = vadd.f32 %v2800, 1e-05
  %v2803 = vrsqrt.pop %v2801
  %v2804 = vrsqrt.pop %v2802
  %v2805 = vmul.f32 %v2789, %v2803
  %v2806 = vmul.f32 %v2790, %v2804
  %v2807 = vlaneseq
  %v2808 = vshrl.u32 %v2807, 7
  %v2809 = vsub.s32 3, %v2808
  %v2810 = vrot.slane %v41, %v2809
  %v2811 = vmul.f32 %v2805, %v2810
  %v2812 = vmul.f32 %v2806, %v2810
  %v2813 = vlaneseq
  %v2814 = vshrl.u32 %v2813, 7
  %v2815 = vsub.s32 4, %v2814
  %v2816 = vrot.slane %v41, %v2815
  %v2817 = vadd.f32 %v2811, %v2816
  %v2818 = vadd.f32 %v2812, %v2816
  %v2819 = vld [vmem:[%s5] sm:$0xff]
  %v2820 = vld [vmem:[%s5 + $0x8] sm:$0xff]
  %v2821 = vld [vmem:[%s5 + $0x10] sm:$0xff]
  %v2822 = vld [vmem:[%s5 + $0x18] sm:$0xff]
  %v2823 = vld [vmem:[%s9] sm:$0x1]
  %v2825 = vlaneseq
  %v2826 = vshrl.u32 %v2825, 7
  %v2827 = vsub.s32 0, %v2826
  %v2828 = vrot.slane %v2823, %v2827
  %v2831 = vsel %vm53, %v2817, 0
  %v2834 = vsel %vm53, %v2818, 0
  %2836 = vmatprep.subr.mxu0 0.0
  %2837 = vmatpush1.msra.mxu0 %v2819
  %2838 = vmatprep.subr.mxu0 0.0
  %2839 = vmatpush1.msra.mxu0 %v2820
  %2840 = vmatprep.subr.mxu0 0.0
  %2841 = vmatpush1.msra.mxu0 %v2821
  %2842 = vmatprep.subr.mxu0 0.0
  %2843 = vmatpush1.msra.mxu0 %v2822
  %2844 = vmatprep.subr.mxu0 0.0
  %2845 = vmatpush1.msra.mxu0 0.0
  %2846 = vmatprep.subr.mxu0 0.0
  %2847 = vmatpush1.msra.mxu0 0.0
  %2848 = vmatprep.subr.mxu0 0.0
  %2849 = vmatpush1.msra.mxu0 0.0
  %2850 = vmatprep.subr.mxu0 0.0
  %2851 = vmatpush1.msra.mxu0 0.0
  %2852 = vmatprep.subr.mxu0 0.0
  %2853 = vmatpush1.msra.mxu0 0.0
  %2854 = vmatprep.subr.mxu0 0.0
  %2855 = vmatpush1.msra.mxu0 0.0
  %2856 = vmatprep.subr.mxu0 0.0
  %2857 = vmatpush1.msra.mxu0 0.0
  %2858 = vmatprep.subr.mxu0 0.0
  %2859 = vmatpush1.msra.mxu0 0.0
  %2860 = vmatprep.subr.mxu0 0.0
  %2861 = vmatpush1.msra.mxu0 0.0
  %2862 = vmatprep.subr.mxu0 0.0
  %2863 = vmatpush1.msra.mxu0 0.0
  %2864 = vmatprep.subr.mxu0 0.0
  %2865 = vmatpush1.msra.mxu0 0.0
  %2866 = vmatprep.subr.mxu0 0.0
  %2867 = vmatpush1.msra.mxu0 0.0
  %2868 = vmatprep.subr.mxu0 0.0
  %2869 = vmatpush1.msra.mxu0 0.0
  %2870 = vmatprep.subr.mxu0 0.0
  %2871 = vmatpush1.msra.mxu0 0.0
  %2872 = vmatprep.subr.mxu0 0.0
  %2873 = vmatpush1.msra.mxu0 0.0
  %2874 = vmatprep.subr.mxu0 0.0
  %2875 = vmatpush1.msra.mxu0 0.0
  %2876 = vmatprep.subr.mxu0 0.0
  %2877 = vmatpush1.msra.mxu0 0.0
  %2878 = vmatprep.subr.mxu0 0.0
  %2879 = vmatpush1.msra.mxu0 0.0
  %2880 = vmatprep.subr.mxu0 0.0
  %2881 = vmatpush1.msra.mxu0 0.0
  %2882 = vmatprep.subr.mxu0 0.0
  %2883 = vmatpush1.msra.mxu0 0.0
  %2884 = vmatprep.subr.mxu0 0.0
  %2885 = vmatpush1.msra.mxu0 0.0
  %2886 = vmatprep.subr.mxu0 0.0
  %2887 = vmatpush1.msra.mxu0 0.0
  %2888 = vmatprep.subr.mxu0 0.0
  %2889 = vmatpush1.msra.mxu0 0.0
  %2890 = vmatprep.subr.mxu0 0.0
  %2891 = vmatpush1.msra.mxu0 0.0
  %2892 = vmatprep.subr.mxu0 0.0
  %2893 = vmatpush1.msra.mxu0 0.0
  %2894 = vmatprep.subr.mxu0 0.0
  %2895 = vmatpush1.msra.mxu0 0.0
  %2896 = vmatprep.subr.mxu0 0.0
  %2897 = vmatpush1.msra.mxu0 0.0
  %2898 = vmatprep.subr.mxu0 0.0
  %2899 = vmatpush1.msra.mxu0 0.0
  %2900 = vmatprep.mubr.f32.mxu0 0.0
  %2901 = vmatmul.mubr.f32.gmra.mrb[0].mxu0 %v2831
  %v2902 = vpop.f32.mrb[0].mxu0
  %v2903 = vadd.f32 %v2828, %v2902
  %v2904 = vpop.f32.mrb[0].mxu0
  %2905 = vmatprep.mubr.f32.mxu0 0.0
  %2906 = vmatmul.mubr.f32.gmra.mrb[0].mxu0 %v2834
  %v2907 = vpop.f32.mrb[0].mxu0
  %v2908 = vadd.f32 %v2828, %v2907
  %v2909 = vpop.f32.mrb[0].mxu0
  %2910 = vdwg.mxu0
  %v2911 = vmax.f32 %v2903, 0.0
  %v2912 = vmax.f32 %v2908, 0.0
  %v2913 = vld [vmem:[%s6] sm:$0xff]
  %v2914 = vld [vmem:[%s6 + $0x8] sm:$0xff]
  %v2915 = vld [vmem:[%s6 + $0x10] sm:$0xff]
  %v2916 = vld [vmem:[%s6 + $0x18] sm:$0xff]
  %v2917 = vld [vmem:[%s6 + $0x20] sm:$0xff]
  %v2918 = vld [vmem:[%s6 + $0x28] sm:$0xff]
  %v2919 = vld [vmem:[%s6 + $0x30] sm:$0xff]
  %v2920 = vld [vmem:[%s6 + $0x38] sm:$0xff]
  %v2921 = vlaneseq
  %v2922 = vshrl.u32 %v2921, 7
  %v2923 = vsub.s32 2, %v2922
  %v2924 = vrot.slane %v41, %v2923
  %vm2925 = vcmask 523264
  %v2927 = vsel %vm2925, %v2911, 0
  %v2930 = vsel %vm2925, %v2912, 0
  %2932 = vmatprep.subr.mxu0 0.0
  %2933 = vmatpush1.msra.mxu0 %v2913
  %2934 = vmatprep.subr.mxu0 0.0
  %2935 = vmatpush1.msra.mxu0 %v2914
  %2936 = vmatprep.subr.mxu0 0.0
  %2937 = vmatpush1.msra.mxu0 %v2915
  %2938 = vmatprep.subr.mxu0 0.0
  %2939 = vmatpush1.msra.mxu0 %v2916
  %2940 = vmatprep.subr.mxu0 0.0
  %2941 = vmatpush1.msra.mxu0 %v2917
  %2942 = vmatprep.subr.mxu0 0.0
  %2943 = vmatpush1.msra.mxu0 %v2918
  %2944 = vmatprep.subr.mxu0 0.0
  %2945 = vmatpush1.msra.mxu0 %v2919
  %2946 = vmatprep.subr.mxu0 0.0
  %2947 = vmatpush1.msra.mxu0 %v2920
  %2948 = vmatprep.subr.mxu0 0.0
  %2949 = vmatpush1.msra.mxu0 0.0
  %2950 = vmatprep.subr.mxu0 0.0
  %2951 = vmatpush1.msra.mxu0 0.0
  %2952 = vmatprep.subr.mxu0 0.0
  %2953 = vmatpush1.msra.mxu0 0.0
  %2954 = vmatprep.subr.mxu0 0.0
  %2955 = vmatpush1.msra.mxu0 0.0
  %2956 = vmatprep.subr.mxu0 0.0
  %2957 = vmatpush1.msra.mxu0 0.0
  %2958 = vmatprep.subr.mxu0 0.0
  %2959 = vmatpush1.msra.mxu0 0.0
  %2960 = vmatprep.subr.mxu0 0.0
  %2961 = vmatpush1.msra.mxu0 0.0
  %2962 = vmatprep.subr.mxu0 0.0
  %2963 = vmatpush1.msra.mxu0 0.0
  %2964 = vmatprep.subr.mxu0 0.0
  %2965 = vmatpush1.msra.mxu0 0.0
  %2966 = vmatprep.subr.mxu0 0.0
  %2967 = vmatpush1.msra.mxu0 0.0
  %2968 = vmatprep.subr.mxu0 0.0
  %2969 = vmatpush1.msra.mxu0 0.0
  %2970 = vmatprep.subr.mxu0 0.0
  %2971 = vmatpush1.msra.mxu0 0.0
  %2972 = vmatprep.subr.mxu0 0.0
  %2973 = vmatpush1.msra.mxu0 0.0
  %2974 = vmatprep.subr.mxu0 0.0
  %2975 = vmatpush1.msra.mxu0 0.0
  %2976 = vmatprep.subr.mxu0 0.0
  %2977 = vmatpush1.msra.mxu0 0.0
  %2978 = vmatprep.subr.mxu0 0.0
  %2979 = vmatpush1.msra.mxu0 0.0
  %2980 = vmatprep.subr.mxu0 0.0
  %2981 = vmatpush1.msra.mxu0 0.0
  %2982 = vmatprep.subr.mxu0 0.0
  %2983 = vmatpush1.msra.mxu0 0.0
  %2984 = vmatprep.subr.mxu0 0.0
  %2985 = vmatpush1.msra.mxu0 0.0
  %2986 = vmatprep.subr.mxu0 0.0
  %2987 = vmatpush1.msra.mxu0 0.0
  %2988 = vmatprep.subr.mxu0 0.0
  %2989 = vmatpush1.msra.mxu0 0.0
  %2990 = vmatprep.subr.mxu0 0.0
  %2991 = vmatpush1.msra.mxu0 0.0
  %2992 = vmatprep.subr.mxu0 0.0
  %2993 = vmatpush1.msra.mxu0 0.0
  %2994 = vmatprep.subr.mxu0 0.0
  %2995 = vmatpush1.msra.mxu0 0.0
  %2996 = vmatprep.mubr.f32.mxu0 0.0
  %2997 = vmatmul.mubr.f32.gmra.mrb[0].mxu0 %v2927
  %v2998 = vpop.f32.mrb[0].mxu0
  %v2999 = vadd.f32 %v2924, %v2998
  %v3000 = vpop.f32.mrb[0].mxu0
  %3001 = vmatprep.mubr.f32.mxu0 0.0
  %3002 = vmatmul.mubr.f32.gmra.mrb[0].mxu0 %v2930
  %v3003 = vpop.f32.mrb[0].mxu0
  %v3004 = vadd.f32 %v2924, %v3003
  %v3005 = vpop.f32.mrb[0].mxu0
  %3006 = vdwg.mxu0
  %v3007 = vadd.f32 %v2817, %v2999
  %v3008 = vadd.f32 %v2818, %v3004
  %v3009 = vsel %vm53, %v3007, 0.0
  %3010 = vadd.xlane.f32.xlu0 %v3009
  %v3011 = vpop.xlane.xlu0 %3010
  %v3012 = vsel %vm53, %v3008, 0.0
  %3013 = vadd.xlane.f32.xlu0 %v3012
  %v3014 = vpop.xlane.xlu0 %3013
  %v3015 = vmul.f32 %v3011, %v2786
  %v3016 = vmul.f32 %v3014, %v2786
  %v3017 = vsub.f32 %v3007, %v3015
  %v3018 = vsub.f32 %v3008, %v3016
  %v3019 = vmul.f32 %v3017, %v3017
  %v3020 = vmul.f32 %v3018, %v3018
  %v3021 = vsel %vm53, %v3019, 0.0
  %3022 = vadd.xlane.f32.xlu0 %v3021
  %v3023 = vpop.xlane.xlu0 %3022
  %v3024 = vsel %vm53, %v3020, 0.0
  %3025 = vadd.xlane.f32.xlu0 %v3024
  %v3026 = vpop.xlane.xlu0 %3025
  %v3027 = vmul.f32 %v3023, %v2786
  %v3028 = vmul.f32 %v3026, %v2786
  %v3029 = vadd.f32 %v3027, 1e-05
  %v3030 = vadd.f32 %v3028, 1e-05
  %v3031 = vrsqrt.pop %v3029
  %v3032 = vrsqrt.pop %v3030
  %v3033 = vmul.f32 %v3017, %v3031
  %v3034 = vmul.f32 %v3018, %v3032
  %v3035 = vlaneseq
  %v3036 = vshrl.u32 %v3035, 7
  %v3037 = vsub.s32 5, %v3036
  %v3038 = vrot.slane %v41, %v3037
  %v3039 = vmul.f32 %v3033, %v3038
  %v3040 = vmul.f32 %v3034, %v3038
  %v3041 = vlaneseq
  %v3042 = vshrl.u32 %v3041, 7
  %v3043 = vsub.s32 6, %v3042
  %v3044 = vrot.slane %v41, %v3043
  %v3045 = vadd.f32 %v3039, %v3044
  %v3046 = vadd.f32 %v3040, %v3044
  %3047 = vst.msk [vmem:[%s10] sm:$0xff] %vm53, %v3045
  %3048 = vst.msk [vmem:[%s10 + $0x8] sm:$0xff] %vm53, %v3046
  // Predicated region
  $region42: #{transformer_encoder_layer.1} parent=0 // pred_check
    _
  $region43: #{transformer_encoder_layer.1} parent=0 // pred_check_branch
    %3050 = sbr.rel (0) target = $region45
  $region44: #{transformer_encoder_layer.1} parent=0 // pred_region
    _
  $region45: #{transformer_encoder_layer.1} parent=0 // pred_fallthru
    _
  // Predicated region
  $region46: #{transformer_encoder_layer.1} parent=0 // pred_check
    _
  $region47: #{transformer_encoder_layer.1} parent=0 // pred_check_branch
    %3052 = sbr.rel (0) target = $region49
  $region48: #{transformer_encoder_layer.1} parent=0 // pred_region
    _
  $region49: #{transformer_encoder_layer.1} parent=0 // pred_fallthru
    _

</llo_original>
